<compile_context>
chip_gen: v5e
topology: v5e:2x2
jax: 0.10.0
libtpu: 0.0.40
codegen_flags: <defaults>
</compile_context>

<pallas_src>
import functools

import jax
import jax.numpy as jnp
from jax import lax
from jax.experimental import pallas as pl
from jax.experimental.pallas import tpu as pltpu

KSIZE = 7
PAD = 3  # padding=3 for kernel_size=7


def _round_up(x, m):
    return (x + m - 1) // m * m


def _padded_plane_bytes(h, w, dtype):
    """True VMEM bytes of one (h, w) plane after (sublane, lane) tiling."""
    itemsize = jnp.dtype(dtype).itemsize
    sublane = max(8, 32 // itemsize)        # f32: 8, bf16: 16, int8/fp8: 32
    return _round_up(h, sublane) * _round_up(w, 128) * itemsize


def _conv7x7_sigmoid(mx, w_ref, pbuf_ref, H, W, Wp, out_dtype):
    """sigmoid(conv7x7_same(mx)) for one (H, W) f32 map via roll-wrap.

    pbuf_ref is an (Hp, Wp) f32 scratch with Hp >= H + 2*PAD, Wp >= W + PAD.
    The map is placed at rows [PAD:PAD+H], cols [0:W]; everything else is
    zero, so lane-rolls that wrap land in the zero border and the result
    equals zero-padded convolution.
    """
    pbuf_ref[...] = jnp.zeros_like(pbuf_ref)
    pbuf_ref[PAD:PAD + H, 0:W] = mx

    # 7 row bands (static sublane-offset slices), reused for every kx.
    bands = [pbuf_ref[ky:ky + H, :] for ky in range(KSIZE)]   # each (H, Wp)

    # Vertical-first: per kx accumulate the 7 vertical taps (49 FMAs total),
    # then one lane roll per nonzero horizontal shift (6 rolls total).
    acc = jnp.zeros((H, Wp), jnp.float32)
    for kx in range(KSIZE):
        part = bands[0] * w_ref[0, kx]
        for ky in range(1, KSIZE):
            part = part + bands[ky] * w_ref[ky, kx]
        shift = (PAD - kx) % Wp                      # tap[j] = part[j + kx - 3]
        if shift != 0:
            part = pltpu.roll(part, shift, axis=1)   # wrapped lanes hit zeros
        acc = acc + part

    return jax.nn.sigmoid(acc[:, 0:W]).astype(out_dtype)


def spatial_attention_kernel(w_ref, x_ref, o_ref, *scratch,
                             num_c_blocks, n_tile, H, W, Wp):
    # w_ref    : (7, 7) f32 in SMEM (conv weight, scalar-indexed)
    # x_ref    : (n_tile, c_tile, H, W) VMEM block
    # o_ref    : (n_tile, 1, H, W) VMEM block (revisited across channel axis)
    # scratch  : [mmax (n_tile,H,W) f32]  (only if num_c_blocks > 1)
    #            [pbuf (Hp,Wp) f32]       (always)
    if num_c_blocks > 1:
        mmax_ref, pbuf_ref = scratch
    else:
        mmax_ref, (pbuf_ref,) = None, scratch

    # Channel max of this channel tile, all n of the block at once.
    blk = jnp.max(x_ref[...], axis=1).astype(jnp.float32)   # (n_tile, H, W)

    def finalize(mx):
        for n in range(n_tile):
            o_ref[n, 0] = _conv7x7_sigmoid(mx[n], w_ref, pbuf_ref,
                                           H, W, Wp, o_ref.dtype)

    if num_c_blocks == 1:
        # Single-pass mode: whole C fits this block; no accumulate roundtrip.
        finalize(blk)
    else:
        c = pl.program_id(1)

        @pl.when(c == 0)
        def _():
            mmax_ref[...] = blk                      # full-ref, origin-aligned

        @pl.when(c != 0)
        def _():
            mmax_ref[...] = jnp.maximum(mmax_ref[...], blk)

        @pl.when(c == num_c_blocks - 1)
        def _():
            finalize(mmax_ref[...])


def _choose_tiles(N, C, H, W, dtype, block_budget_bytes=8 << 20):
    """Largest (n_tile, c_tile) whose *padded* x block fits the budget."""
    plane = _padded_plane_bytes(H, W, dtype)
    c_tile = 1
    for t in range(1, C + 1):
        if C % t == 0 and t * plane <= block_budget_bytes:
            c_tile = t
    n_tile = 1
    if c_tile == C:  # whole channel slab fits: batch n to amortize step cost
        for t in range(1, N + 1):
            if N % t == 0 and t * C * plane <= block_budget_bytes:
                n_tile = t
    return n_tile, c_tile


def spatial_attention(x, weight, *, n_tile=None, c_tile=None):
    """x: (N, C, H, W); weight: (7, 7). Returns sigmoid(conv7x7(max_c(x)))."""
    N, C, H, W = x.shape
    auto_n, auto_c = _choose_tiles(N, C, H, W, x.dtype)
    if c_tile is None:
        c_tile = auto_c
    if n_tile is None:
        n_tile = auto_n if c_tile == C else 1
    assert C % c_tile == 0, (C, c_tile)
    assert N % n_tile == 0, (N, n_tile)
    assert n_tile == 1 or c_tile == C, "n_tile > 1 only in single-pass mode"

    num_c_blocks = C // c_tile
    Hp = _round_up(H + 2 * PAD, 8)      # sublane-aligned padded height
    Wp = _round_up(W + PAD, 128)        # lane-dense padded width
    # Zero-border invariants required by the lane roll-wrap trick.
    assert Wp >= W + PAD and Hp >= H + 2 * PAD, (Hp, Wp, H, W)

    weight = jnp.asarray(weight, jnp.float32).reshape(KSIZE, KSIZE)

    kernel = functools.partial(
        spatial_attention_kernel,
        num_c_blocks=num_c_blocks, n_tile=n_tile, H=H, W=W, Wp=Wp)

    scratch_shapes = []
    if num_c_blocks > 1:
        scratch_shapes.append(pltpu.VMEM((n_tile, H, W), jnp.float32))
    scratch_shapes.append(pltpu.VMEM((Hp, Wp), jnp.float32))

    # Padded-layout VMEM accounting: 2x input double buffering, resident
    # output (x2), scratches, plus headroom for finalize temporaries.
    x_block = 2 * n_tile * c_tile * _padded_plane_bytes(H, W, x.dtype)
    o_block = 2 * n_tile * _padded_plane_bytes(H, W, x.dtype)
    mmax_b = (n_tile * _padded_plane_bytes(H, W, jnp.float32)
              if num_c_blocks > 1 else 0)
    pbuf_b = Hp * Wp * 4
    temps = 10 * Hp * Wp * 4
    need = x_block + o_block + mmax_b + pbuf_b + temps
    vmem_limit = int(min(max(need + (4 << 20), 32 << 20), 48 << 20))

    itemsize = jnp.dtype(x.dtype).itemsize
    cost = pl.CostEstimate(
        flops=int(N * C * H * W + N * 2 * KSIZE * KSIZE * H * W),
        transcendentals=int(N * H * W),
        bytes_accessed=int(N * C * H * W * itemsize + N * H * W * itemsize
                           + KSIZE * KSIZE * 4),
    )

    return pl.pallas_call(
        kernel,
        out_shape=jax.ShapeDtypeStruct((N, 1, H, W), x.dtype),
        grid_spec=pltpu.PrefetchScalarGridSpec(
            num_scalar_prefetch=0,
            grid=(N // n_tile, num_c_blocks),
            in_specs=[
                pl.BlockSpec(memory_space=pltpu.MemorySpace.SMEM),   # (7,7) w
                pl.BlockSpec((n_tile, c_tile, H, W),
                             lambda nb, cb: (nb, cb, 0, 0)),
            ],
            out_specs=pl.BlockSpec((n_tile, 1, H, W),
                                   lambda nb, cb: (nb, 0, 0, 0)),
            scratch_shapes=scratch_shapes,
        ),
        compiler_params=pltpu.CompilerParams(
            dimension_semantics=("parallel", "arbitrary"),
            vmem_limit_bytes=vmem_limit),
        cost_estimate=cost,
    )(weight, x)


def spatial_attention_ref(x, weight):
    """Pure-JAX reference matching the PyTorch forward."""
    m = jnp.max(x, axis=1, keepdims=True)
    w = weight.reshape(1, 1, KSIZE, KSIZE)
    y = lax.conv_general_dilated(
        m.astype(jnp.float32), w.astype(jnp.float32),
        window_strides=(1, 1), padding=((PAD, PAD), (PAD, PAD)),
        dimension_numbers=("NCHW", "OIHW", "NCHW"))
    return jax.nn.sigmoid(y).astype(x.dtype)


if __name__ == "__main__":
    key = jax.random.PRNGKey(0)
    kx_key, kw_key = jax.random.split(key)

    N, C, H, W = 2, 4, 16, 16
    x = jax.random.normal(kx_key, (N, C, H, W), dtype=jnp.float32)

    # Deterministic weight init mimicking nn.Conv2d default (uniform in
    # [-1/sqrt(fan_in), 1/sqrt(fan_in)], fan_in = 1*7*7 = 49).
    bound = 1.0 / (KSIZE * KSIZE) ** 0.5
    weight = jax.random.uniform(kw_key, (KSIZE, KSIZE), jnp.float32,
                                minval=-bound, maxval=bound)

    ref = spatial_attention_ref(x, weight)

    # Auto tiling: whole padded (C,H,W) slab fits -> single-pass kernel with
    # n_tile batch elements per grid step.
    out = jax.block_until_ready(spatial_attention(x, weight))
    assert out.shape == (N, 1, H, W), out.shape
    err = jnp.max(jnp.abs(out - ref))
    assert jnp.allclose(out, ref, atol=1e-5, rtol=1e-5), f"max err = {err}"

    # Forced channel-reduction path (c_tile=2 -> init/accumulate/finalize).
    out2 = jax.block_until_ready(spatial_attention(x, weight, c_tile=2))
    err2 = jnp.max(jnp.abs(out2 - ref))
    assert jnp.allclose(out2, ref, atol=1e-5, rtol=1e-5), f"max err = {err2}"

    print("KERNEL_OK")
</pallas_src>

<mosaic_0001>
module attributes {stable_mosaic.version = 11 : i64} {
  func.func @spatial_attention_kernel(%arg0: i32, %arg1: i32, %arg2: memref<7x7xf32, #tpu.memory_space<smem>>, %arg3: memref<2x4x16x16xf32, #tpu.memory_space<vmem>>, %arg4: memref<2x1x16x16xf32, #tpu.memory_space<vmem>>, %arg5: memref<24x128xf32, #tpu.memory_space<vmem>>) attributes {dimension_semantics = [#tpu.dimension_semantics<parallel>, #tpu.dimension_semantics<arbitrary>], iteration_bounds = array<i64: 1, 1>, scalar_prefetch = 0 : i64, scratch_operands = 1 : i64, tpu.core_type = #tpu.core_type<tc>, window_params = [{transform_indices = @transform_0, window_bounds = array<i64: 7, 7>}, {transform_indices = @transform_1, window_bounds = array<i64: 2, 4, 16, 16>}, {transform_indices = @transform_2, window_bounds = array<i64: 2, 1, 16, 16>}]} {
    %c0 = arith.constant 0 : index
    %c0_0 = arith.constant 0 : index
    %c0_1 = arith.constant 0 : index
    %c0_2 = arith.constant 0 : index
    %0 = vector.load %arg3[%c0, %c0_0, %c0_1, %c0_2] : memref<2x4x16x16xf32, #tpu.memory_space<vmem>>, vector<2x4x16x16xf32>
    %cst = arith.constant dense<0xFF800000> : vector<2x16x16xf32>
    %1 = vector.multi_reduction <maximumf>, %0, %cst [1] : vector<2x4x16x16xf32> to vector<2x16x16xf32>
    %2 = vector.extract_strided_slice %1 {offsets = [0, 0, 0], sizes = [1, 16, 16], strides = [1, 1, 1]} : vector<2x16x16xf32> to vector<1x16x16xf32>
    %3 = vector.shape_cast %2 : vector<1x16x16xf32> to vector<16x16xf32>
    %cst_3 = arith.constant 0.000000e+00 : f32
    %4 = vector.broadcast %cst_3 : f32 to vector<24x128xf32>
    %c0_4 = arith.constant 0 : index
    %c0_5 = arith.constant 0 : index
    %5 = vector.load %arg5[%c0_4, %c0_5] : memref<24x128xf32, #tpu.memory_space<vmem>>, vector<24x128xf32>
    tpu.vector_store %arg5[%c0_4, %c0_5], %4 {strides = array<i32>} : memref<24x128xf32, #tpu.memory_space<vmem>>, vector<24x128xf32>,
    %c3 = arith.constant 3 : index
    %c0_6 = arith.constant 0 : index
    %6 = vector.load %arg5[%c3, %c0_6] : memref<24x128xf32, #tpu.memory_space<vmem>>, vector<16x16xf32>
    tpu.vector_store %arg5[%c3, %c0_6], %3 {strides = array<i32>} : memref<24x128xf32, #tpu.memory_space<vmem>>, vector<16x16xf32>,
    %c0_7 = arith.constant 0 : index
    %c0_8 = arith.constant 0 : index
    %7 = vector.load %arg5[%c0_7, %c0_8] : memref<24x128xf32, #tpu.memory_space<vmem>>, vector<16x128xf32>
    %c1 = arith.constant 1 : index
    %c0_9 = arith.constant 0 : index
    %8 = vector.load %arg5[%c1, %c0_9] : memref<24x128xf32, #tpu.memory_space<vmem>>, vector<16x128xf32>
    %c2 = arith.constant 2 : index
    %c0_10 = arith.constant 0 : index
    %9 = vector.load %arg5[%c2, %c0_10] : memref<24x128xf32, #tpu.memory_space<vmem>>, vector<16x128xf32>
    %c3_11 = arith.constant 3 : index
    %c0_12 = arith.constant 0 : index
    %10 = vector.load %arg5[%c3_11, %c0_12] : memref<24x128xf32, #tpu.memory_space<vmem>>, vector<16x128xf32>
    %c4 = arith.constant 4 : index
    %c0_13 = arith.constant 0 : index
    %11 = vector.load %arg5[%c4, %c0_13] : memref<24x128xf32, #tpu.memory_space<vmem>>, vector<16x128xf32>
    %c5 = arith.constant 5 : index
    %c0_14 = arith.constant 0 : index
    %12 = vector.load %arg5[%c5, %c0_14] : memref<24x128xf32, #tpu.memory_space<vmem>>, vector<16x128xf32>
    %c6 = arith.constant 6 : index
    %c0_15 = arith.constant 0 : index
    %13 = vector.load %arg5[%c6, %c0_15] : memref<24x128xf32, #tpu.memory_space<vmem>>, vector<16x128xf32>
    %cst_16 = arith.constant 0.000000e+00 : f32
    %14 = vector.broadcast %cst_16 : f32 to vector<16x128xf32>
    %c0_17 = arith.constant 0 : index
    %c0_18 = arith.constant 0 : index
    %15 = memref.load %arg2[%c0_17, %c0_18] : memref<7x7xf32, #tpu.memory_space<smem>>
    %16 = vector.broadcast %15 : f32 to vector<16x128xf32>
    %17 = arith.mulf %7, %16 : vector<16x128xf32>
    %c1_19 = arith.constant 1 : index
    %c0_20 = arith.constant 0 : index
    %18 = memref.load %arg2[%c1_19, %c0_20] : memref<7x7xf32, #tpu.memory_space<smem>>
    %19 = vector.broadcast %18 : f32 to vector<16x128xf32>
    %20 = arith.mulf %8, %19 : vector<16x128xf32>
    %21 = arith.addf %17, %20 : vector<16x128xf32>
    %c2_21 = arith.constant 2 : index
    %c0_22 = arith.constant 0 : index
    %22 = memref.load %arg2[%c2_21, %c0_22] : memref<7x7xf32, #tpu.memory_space<smem>>
    %23 = vector.broadcast %22 : f32 to vector<16x128xf32>
    %24 = arith.mulf %9, %23 : vector<16x128xf32>
    %25 = arith.addf %21, %24 : vector<16x128xf32>
    %c3_23 = arith.constant 3 : index
    %c0_24 = arith.constant 0 : index
    %26 = memref.load %arg2[%c3_23, %c0_24] : memref<7x7xf32, #tpu.memory_space<smem>>
    %27 = vector.broadcast %26 : f32 to vector<16x128xf32>
    %28 = arith.mulf %10, %27 : vector<16x128xf32>
    %29 = arith.addf %25, %28 : vector<16x128xf32>
    %c4_25 = arith.constant 4 : index
    %c0_26 = arith.constant 0 : index
    %30 = memref.load %arg2[%c4_25, %c0_26] : memref<7x7xf32, #tpu.memory_space<smem>>
    %31 = vector.broadcast %30 : f32 to vector<16x128xf32>
    %32 = arith.mulf %11, %31 : vector<16x128xf32>
    %33 = arith.addf %29, %32 : vector<16x128xf32>
    %c5_27 = arith.constant 5 : index
    %c0_28 = arith.constant 0 : index
    %34 = memref.load %arg2[%c5_27, %c0_28] : memref<7x7xf32, #tpu.memory_space<smem>>
    %35 = vector.broadcast %34 : f32 to vector<16x128xf32>
    %36 = arith.mulf %12, %35 : vector<16x128xf32>
    %37 = arith.addf %33, %36 : vector<16x128xf32>
    %c6_29 = arith.constant 6 : index
    %c0_30 = arith.constant 0 : index
    %38 = memref.load %arg2[%c6_29, %c0_30] : memref<7x7xf32, #tpu.memory_space<smem>>
    %39 = vector.broadcast %38 : f32 to vector<16x128xf32>
    %40 = arith.mulf %13, %39 : vector<16x128xf32>
    %41 = arith.addf %37, %40 : vector<16x128xf32>
    %c3_i32 = arith.constant 3 : i32
    %42 = tpu.dynamic_rotate %41 by %c3_i32 dim 1 : vector<16x128xf32>, i32 -> vector<16x128xf32>
    %43 = arith.addf %14, %42 : vector<16x128xf32>
    %c0_31 = arith.constant 0 : index
    %c1_32 = arith.constant 1 : index
    %44 = memref.load %arg2[%c0_31, %c1_32] : memref<7x7xf32, #tpu.memory_space<smem>>
    %45 = vector.broadcast %44 : f32 to vector<16x128xf32>
    %46 = arith.mulf %7, %45 : vector<16x128xf32>
    %c1_33 = arith.constant 1 : index
    %c1_34 = arith.constant 1 : index
    %47 = memref.load %arg2[%c1_33, %c1_34] : memref<7x7xf32, #tpu.memory_space<smem>>
    %48 = vector.broadcast %47 : f32 to vector<16x128xf32>
    %49 = arith.mulf %8, %48 : vector<16x128xf32>
    %50 = arith.addf %46, %49 : vector<16x128xf32>
    %c2_35 = arith.constant 2 : index
    %c1_36 = arith.constant 1 : index
    %51 = memref.load %arg2[%c2_35, %c1_36] : memref<7x7xf32, #tpu.memory_space<smem>>
    %52 = vector.broadcast %51 : f32 to vector<16x128xf32>
    %53 = arith.mulf %9, %52 : vector<16x128xf32>
    %54 = arith.addf %50, %53 : vector<16x128xf32>
    %c3_37 = arith.constant 3 : index
    %c1_38 = arith.constant 1 : index
    %55 = memref.load %arg2[%c3_37, %c1_38] : memref<7x7xf32, #tpu.memory_space<smem>>
    %56 = vector.broadcast %55 : f32 to vector<16x128xf32>
    %57 = arith.mulf %10, %56 : vector<16x128xf32>
    %58 = arith.addf %54, %57 : vector<16x128xf32>
    %c4_39 = arith.constant 4 : index
    %c1_40 = arith.constant 1 : index
    %59 = memref.load %arg2[%c4_39, %c1_40] : memref<7x7xf32, #tpu.memory_space<smem>>
    %60 = vector.broadcast %59 : f32 to vector<16x128xf32>
    %61 = arith.mulf %11, %60 : vector<16x128xf32>
    %62 = arith.addf %58, %61 : vector<16x128xf32>
    %c5_41 = arith.constant 5 : index
    %c1_42 = arith.constant 1 : index
    %63 = memref.load %arg2[%c5_41, %c1_42] : memref<7x7xf32, #tpu.memory_space<smem>>
    %64 = vector.broadcast %63 : f32 to vector<16x128xf32>
    %65 = arith.mulf %12, %64 : vector<16x128xf32>
    %66 = arith.addf %62, %65 : vector<16x128xf32>
    %c6_43 = arith.constant 6 : index
    %c1_44 = arith.constant 1 : index
    %67 = memref.load %arg2[%c6_43, %c1_44] : memref<7x7xf32, #tpu.memory_space<smem>>
    %68 = vector.broadcast %67 : f32 to vector<16x128xf32>
    %69 = arith.mulf %13, %68 : vector<16x128xf32>
    %70 = arith.addf %66, %69 : vector<16x128xf32>
    %c2_i32 = arith.constant 2 : i32
    %71 = tpu.dynamic_rotate %70 by %c2_i32 dim 1 : vector<16x128xf32>, i32 -> vector<16x128xf32>
    %72 = arith.addf %43, %71 : vector<16x128xf32>
    %c0_45 = arith.constant 0 : index
    %c2_46 = arith.constant 2 : index
    %73 = memref.load %arg2[%c0_45, %c2_46] : memref<7x7xf32, #tpu.memory_space<smem>>
    %74 = vector.broadcast %73 : f32 to vector<16x128xf32>
    %75 = arith.mulf %7, %74 : vector<16x128xf32>
    %c1_47 = arith.constant 1 : index
    %c2_48 = arith.constant 2 : index
    %76 = memref.load %arg2[%c1_47, %c2_48] : memref<7x7xf32, #tpu.memory_space<smem>>
    %77 = vector.broadcast %76 : f32 to vector<16x128xf32>
    %78 = arith.mulf %8, %77 : vector<16x128xf32>
    %79 = arith.addf %75, %78 : vector<16x128xf32>
    %c2_49 = arith.constant 2 : index
    %c2_50 = arith.constant 2 : index
    %80 = memref.load %arg2[%c2_49, %c2_50] : memref<7x7xf32, #tpu.memory_space<smem>>
    %81 = vector.broadcast %80 : f32 to vector<16x128xf32>
    %82 = arith.mulf %9, %81 : vector<16x128xf32>
    %83 = arith.addf %79, %82 : vector<16x128xf32>
    %c3_51 = arith.constant 3 : index
    %c2_52 = arith.constant 2 : index
    %84 = memref.load %arg2[%c3_51, %c2_52] : memref<7x7xf32, #tpu.memory_space<smem>>
    %85 = vector.broadcast %84 : f32 to vector<16x128xf32>
    %86 = arith.mulf %10, %85 : vector<16x128xf32>
    %87 = arith.addf %83, %86 : vector<16x128xf32>
    %c4_53 = arith.constant 4 : index
    %c2_54 = arith.constant 2 : index
    %88 = memref.load %arg2[%c4_53, %c2_54] : memref<7x7xf32, #tpu.memory_space<smem>>
    %89 = vector.broadcast %88 : f32 to vector<16x128xf32>
    %90 = arith.mulf %11, %89 : vector<16x128xf32>
    %91 = arith.addf %87, %90 : vector<16x128xf32>
    %c5_55 = arith.constant 5 : index
    %c2_56 = arith.constant 2 : index
    %92 = memref.load %arg2[%c5_55, %c2_56] : memref<7x7xf32, #tpu.memory_space<smem>>
    %93 = vector.broadcast %92 : f32 to vector<16x128xf32>
    %94 = arith.mulf %12, %93 : vector<16x128xf32>
    %95 = arith.addf %91, %94 : vector<16x128xf32>
    %c6_57 = arith.constant 6 : index
    %c2_58 = arith.constant 2 : index
    %96 = memref.load %arg2[%c6_57, %c2_58] : memref<7x7xf32, #tpu.memory_space<smem>>
    %97 = vector.broadcast %96 : f32 to vector<16x128xf32>
    %98 = arith.mulf %13, %97 : vector<16x128xf32>
    %99 = arith.addf %95, %98 : vector<16x128xf32>
    %c1_i32 = arith.constant 1 : i32
    %100 = tpu.dynamic_rotate %99 by %c1_i32 dim 1 : vector<16x128xf32>, i32 -> vector<16x128xf32>
    %101 = arith.addf %72, %100 : vector<16x128xf32>
    %c0_59 = arith.constant 0 : index
    %c3_60 = arith.constant 3 : index
    %102 = memref.load %arg2[%c0_59, %c3_60] : memref<7x7xf32, #tpu.memory_space<smem>>
    %103 = vector.broadcast %102 : f32 to vector<16x128xf32>
    %104 = arith.mulf %7, %103 : vector<16x128xf32>
    %c1_61 = arith.constant 1 : index
    %c3_62 = arith.constant 3 : index
    %105 = memref.load %arg2[%c1_61, %c3_62] : memref<7x7xf32, #tpu.memory_space<smem>>
    %106 = vector.broadcast %105 : f32 to vector<16x128xf32>
    %107 = arith.mulf %8, %106 : vector<16x128xf32>
    %108 = arith.addf %104, %107 : vector<16x128xf32>
    %c2_63 = arith.constant 2 : index
    %c3_64 = arith.constant 3 : index
    %109 = memref.load %arg2[%c2_63, %c3_64] : memref<7x7xf32, #tpu.memory_space<smem>>
    %110 = vector.broadcast %109 : f32 to vector<16x128xf32>
    %111 = arith.mulf %9, %110 : vector<16x128xf32>
    %112 = arith.addf %108, %111 : vector<16x128xf32>
    %c3_65 = arith.constant 3 : index
    %c3_66 = arith.constant 3 : index
    %113 = memref.load %arg2[%c3_65, %c3_66] : memref<7x7xf32, #tpu.memory_space<smem>>
    %114 = vector.broadcast %113 : f32 to vector<16x128xf32>
    %115 = arith.mulf %10, %114 : vector<16x128xf32>
    %116 = arith.addf %112, %115 : vector<16x128xf32>
    %c4_67 = arith.constant 4 : index
    %c3_68 = arith.constant 3 : index
    %117 = memref.load %arg2[%c4_67, %c3_68] : memref<7x7xf32, #tpu.memory_space<smem>>
    %118 = vector.broadcast %117 : f32 to vector<16x128xf32>
    %119 = arith.mulf %11, %118 : vector<16x128xf32>
    %120 = arith.addf %116, %119 : vector<16x128xf32>
    %c5_69 = arith.constant 5 : index
    %c3_70 = arith.constant 3 : index
    %121 = memref.load %arg2[%c5_69, %c3_70] : memref<7x7xf32, #tpu.memory_space<smem>>
    %122 = vector.broadcast %121 : f32 to vector<16x128xf32>
    %123 = arith.mulf %12, %122 : vector<16x128xf32>
    %124 = arith.addf %120, %123 : vector<16x128xf32>
    %c6_71 = arith.constant 6 : index
    %c3_72 = arith.constant 3 : index
    %125 = memref.load %arg2[%c6_71, %c3_72] : memref<7x7xf32, #tpu.memory_space<smem>>
    %126 = vector.broadcast %125 : f32 to vector<16x128xf32>
    %127 = arith.mulf %13, %126 : vector<16x128xf32>
    %128 = arith.addf %124, %127 : vector<16x128xf32>
    %129 = arith.addf %101, %128 : vector<16x128xf32>
    %c0_73 = arith.constant 0 : index
    %c4_74 = arith.constant 4 : index
    %130 = memref.load %arg2[%c0_73, %c4_74] : memref<7x7xf32, #tpu.memory_space<smem>>
    %131 = vector.broadcast %130 : f32 to vector<16x128xf32>
    %132 = arith.mulf %7, %131 : vector<16x128xf32>
    %c1_75 = arith.constant 1 : index
    %c4_76 = arith.constant 4 : index
    %133 = memref.load %arg2[%c1_75, %c4_76] : memref<7x7xf32, #tpu.memory_space<smem>>
    %134 = vector.broadcast %133 : f32 to vector<16x128xf32>
    %135 = arith.mulf %8, %134 : vector<16x128xf32>
    %136 = arith.addf %132, %135 : vector<16x128xf32>
    %c2_77 = arith.constant 2 : index
    %c4_78 = arith.constant 4 : index
    %137 = memref.load %arg2[%c2_77, %c4_78] : memref<7x7xf32, #tpu.memory_space<smem>>
    %138 = vector.broadcast %137 : f32 to vector<16x128xf32>
    %139 = arith.mulf %9, %138 : vector<16x128xf32>
    %140 = arith.addf %136, %139 : vector<16x128xf32>
    %c3_79 = arith.constant 3 : index
    %c4_80 = arith.constant 4 : index
    %141 = memref.load %arg2[%c3_79, %c4_80] : memref<7x7xf32, #tpu.memory_space<smem>>
    %142 = vector.broadcast %141 : f32 to vector<16x128xf32>
    %143 = arith.mulf %10, %142 : vector<16x128xf32>
    %144 = arith.addf %140, %143 : vector<16x128xf32>
    %c4_81 = arith.constant 4 : index
    %c4_82 = arith.constant 4 : index
    %145 = memref.load %arg2[%c4_81, %c4_82] : memref<7x7xf32, #tpu.memory_space<smem>>
    %146 = vector.broadcast %145 : f32 to vector<16x128xf32>
    %147 = arith.mulf %11, %146 : vector<16x128xf32>
    %148 = arith.addf %144, %147 : vector<16x128xf32>
    %c5_83 = arith.constant 5 : index
    %c4_84 = arith.constant 4 : index
    %149 = memref.load %arg2[%c5_83, %c4_84] : memref<7x7xf32, #tpu.memory_space<smem>>
    %150 = vector.broadcast %149 : f32 to vector<16x128xf32>
    %151 = arith.mulf %12, %150 : vector<16x128xf32>
    %152 = arith.addf %148, %151 : vector<16x128xf32>
    %c6_85 = arith.constant 6 : index
    %c4_86 = arith.constant 4 : index
    %153 = memref.load %arg2[%c6_85, %c4_86] : memref<7x7xf32, #tpu.memory_space<smem>>
    %154 = vector.broadcast %153 : f32 to vector<16x128xf32>
    %155 = arith.mulf %13, %154 : vector<16x128xf32>
    %156 = arith.addf %152, %155 : vector<16x128xf32>
    %c127_i32 = arith.constant 127 : i32
    %157 = tpu.dynamic_rotate %156 by %c127_i32 dim 1 : vector<16x128xf32>, i32 -> vector<16x128xf32>
    %158 = arith.addf %129, %157 : vector<16x128xf32>
    %c0_87 = arith.constant 0 : index
    %c5_88 = arith.constant 5 : index
    %159 = memref.load %arg2[%c0_87, %c5_88] : memref<7x7xf32, #tpu.memory_space<smem>>
    %160 = vector.broadcast %159 : f32 to vector<16x128xf32>
    %161 = arith.mulf %7, %160 : vector<16x128xf32>
    %c1_89 = arith.constant 1 : index
    %c5_90 = arith.constant 5 : index
    %162 = memref.load %arg2[%c1_89, %c5_90] : memref<7x7xf32, #tpu.memory_space<smem>>
    %163 = vector.broadcast %162 : f32 to vector<16x128xf32>
    %164 = arith.mulf %8, %163 : vector<16x128xf32>
    %165 = arith.addf %161, %164 : vector<16x128xf32>
    %c2_91 = arith.constant 2 : index
    %c5_92 = arith.constant 5 : index
    %166 = memref.load %arg2[%c2_91, %c5_92] : memref<7x7xf32, #tpu.memory_space<smem>>
    %167 = vector.broadcast %166 : f32 to vector<16x128xf32>
    %168 = arith.mulf %9, %167 : vector<16x128xf32>
    %169 = arith.addf %165, %168 : vector<16x128xf32>
    %c3_93 = arith.constant 3 : index
    %c5_94 = arith.constant 5 : index
    %170 = memref.load %arg2[%c3_93, %c5_94] : memref<7x7xf32, #tpu.memory_space<smem>>
    %171 = vector.broadcast %170 : f32 to vector<16x128xf32>
    %172 = arith.mulf %10, %171 : vector<16x128xf32>
    %173 = arith.addf %169, %172 : vector<16x128xf32>
    %c4_95 = arith.constant 4 : index
    %c5_96 = arith.constant 5 : index
    %174 = memref.load %arg2[%c4_95, %c5_96] : memref<7x7xf32, #tpu.memory_space<smem>>
    %175 = vector.broadcast %174 : f32 to vector<16x128xf32>
    %176 = arith.mulf %11, %175 : vector<16x128xf32>
    %177 = arith.addf %173, %176 : vector<16x128xf32>
    %c5_97 = arith.constant 5 : index
    %c5_98 = arith.constant 5 : index
    %178 = memref.load %arg2[%c5_97, %c5_98] : memref<7x7xf32, #tpu.memory_space<smem>>
    %179 = vector.broadcast %178 : f32 to vector<16x128xf32>
    %180 = arith.mulf %12, %179 : vector<16x128xf32>
    %181 = arith.addf %177, %180 : vector<16x128xf32>
    %c6_99 = arith.constant 6 : index
    %c5_100 = arith.constant 5 : index
    %182 = memref.load %arg2[%c6_99, %c5_100] : memref<7x7xf32, #tpu.memory_space<smem>>
    %183 = vector.broadcast %182 : f32 to vector<16x128xf32>
    %184 = arith.mulf %13, %183 : vector<16x128xf32>
    %185 = arith.addf %181, %184 : vector<16x128xf32>
    %c126_i32 = arith.constant 126 : i32
    %186 = tpu.dynamic_rotate %185 by %c126_i32 dim 1 : vector<16x128xf32>, i32 -> vector<16x128xf32>
    %187 = arith.addf %158, %186 : vector<16x128xf32>
    %c0_101 = arith.constant 0 : index
    %c6_102 = arith.constant 6 : index
    %188 = memref.load %arg2[%c0_101, %c6_102] : memref<7x7xf32, #tpu.memory_space<smem>>
    %189 = vector.broadcast %188 : f32 to vector<16x128xf32>
    %190 = arith.mulf %7, %189 : vector<16x128xf32>
    %c1_103 = arith.constant 1 : index
    %c6_104 = arith.constant 6 : index
    %191 = memref.load %arg2[%c1_103, %c6_104] : memref<7x7xf32, #tpu.memory_space<smem>>
    %192 = vector.broadcast %191 : f32 to vector<16x128xf32>
    %193 = arith.mulf %8, %192 : vector<16x128xf32>
    %194 = arith.addf %190, %193 : vector<16x128xf32>
    %c2_105 = arith.constant 2 : index
    %c6_106 = arith.constant 6 : index
    %195 = memref.load %arg2[%c2_105, %c6_106] : memref<7x7xf32, #tpu.memory_space<smem>>
    %196 = vector.broadcast %195 : f32 to vector<16x128xf32>
    %197 = arith.mulf %9, %196 : vector<16x128xf32>
    %198 = arith.addf %194, %197 : vector<16x128xf32>
    %c3_107 = arith.constant 3 : index
    %c6_108 = arith.constant 6 : index
    %199 = memref.load %arg2[%c3_107, %c6_108] : memref<7x7xf32, #tpu.memory_space<smem>>
    %200 = vector.broadcast %199 : f32 to vector<16x128xf32>
    %201 = arith.mulf %10, %200 : vector<16x128xf32>
    %202 = arith.addf %198, %201 : vector<16x128xf32>
    %c4_109 = arith.constant 4 : index
    %c6_110 = arith.constant 6 : index
    %203 = memref.load %arg2[%c4_109, %c6_110] : memref<7x7xf32, #tpu.memory_space<smem>>
    %204 = vector.broadcast %203 : f32 to vector<16x128xf32>
    %205 = arith.mulf %11, %204 : vector<16x128xf32>
    %206 = arith.addf %202, %205 : vector<16x128xf32>
    %c5_111 = arith.constant 5 : index
    %c6_112 = arith.constant 6 : index
    %207 = memref.load %arg2[%c5_111, %c6_112] : memref<7x7xf32, #tpu.memory_space<smem>>
    %208 = vector.broadcast %207 : f32 to vector<16x128xf32>
    %209 = arith.mulf %12, %208 : vector<16x128xf32>
    %210 = arith.addf %206, %209 : vector<16x128xf32>
    %c6_113 = arith.constant 6 : index
    %c6_114 = arith.constant 6 : index
    %211 = memref.load %arg2[%c6_113, %c6_114] : memref<7x7xf32, #tpu.memory_space<smem>>
    %212 = vector.broadcast %211 : f32 to vector<16x128xf32>
    %213 = arith.mulf %13, %212 : vector<16x128xf32>
    %214 = arith.addf %210, %213 : vector<16x128xf32>
    %c125_i32 = arith.constant 125 : i32
    %215 = tpu.dynamic_rotate %214 by %c125_i32 dim 1 : vector<16x128xf32>, i32 -> vector<16x128xf32>
    %216 = arith.addf %187, %215 : vector<16x128xf32>
    %217 = vector.extract_strided_slice %216 {offsets = [0, 0], sizes = [16, 16], strides = [1, 1]} : vector<16x128xf32> to vector<16x16xf32>
    %218 = arith.negf %217 : vector<16x16xf32>
    %219 = math.exp %218 : vector<16x16xf32>
    %cst_115 = arith.constant 1.000000e+00 : f32
    %220 = vector.broadcast %cst_115 : f32 to vector<16x16xf32>
    %221 = arith.addf %220, %219 : vector<16x16xf32>
    %222 = arith.divf %220, %221 : vector<16x16xf32>
    %c0_116 = arith.constant 0 : index
    %c0_117 = arith.constant 0 : index
    %c0_118 = arith.constant 0 : index
    %c0_119 = arith.constant 0 : index
    %223 = vector.load %arg4[%c0_116, %c0_117, %c0_118, %c0_119] : memref<2x1x16x16xf32, #tpu.memory_space<vmem>>, vector<1x1x16x16xf32>
    %224 = vector.shape_cast %223 : vector<1x1x16x16xf32> to vector<16x16xf32>
    %225 = vector.shape_cast %222 : vector<16x16xf32> to vector<1x1x16x16xf32>
    tpu.vector_store %arg4[%c0_116, %c0_117, %c0_118, %c0_119], %225 {strides = array<i32>} : memref<2x1x16x16xf32, #tpu.memory_space<vmem>>, vector<1x1x16x16xf32>,
    %226 = vector.extract_strided_slice %1 {offsets = [1, 0, 0], sizes = [1, 16, 16], strides = [1, 1, 1]} : vector<2x16x16xf32> to vector<1x16x16xf32>
    %227 = vector.shape_cast %226 : vector<1x16x16xf32> to vector<16x16xf32>
    %cst_120 = arith.constant 0.000000e+00 : f32
    %228 = vector.broadcast %cst_120 : f32 to vector<24x128xf32>
    %c0_121 = arith.constant 0 : index
    %c0_122 = arith.constant 0 : index
    %229 = vector.load %arg5[%c0_121, %c0_122] : memref<24x128xf32, #tpu.memory_space<vmem>>, vector<24x128xf32>
    tpu.vector_store %arg5[%c0_121, %c0_122], %228 {strides = array<i32>} : memref<24x128xf32, #tpu.memory_space<vmem>>, vector<24x128xf32>,
    %c3_123 = arith.constant 3 : index
    %c0_124 = arith.constant 0 : index
    %230 = vector.load %arg5[%c3_123, %c0_124] : memref<24x128xf32, #tpu.memory_space<vmem>>, vector<16x16xf32>
    tpu.vector_store %arg5[%c3_123, %c0_124], %227 {strides = array<i32>} : memref<24x128xf32, #tpu.memory_space<vmem>>, vector<16x16xf32>,
    %c0_125 = arith.constant 0 : index
    %c0_126 = arith.constant 0 : index
    %231 = vector.load %arg5[%c0_125, %c0_126] : memref<24x128xf32, #tpu.memory_space<vmem>>, vector<16x128xf32>
    %c1_127 = arith.constant 1 : index
    %c0_128 = arith.constant 0 : index
    %232 = vector.load %arg5[%c1_127, %c0_128] : memref<24x128xf32, #tpu.memory_space<vmem>>, vector<16x128xf32>
    %c2_129 = arith.constant 2 : index
    %c0_130 = arith.constant 0 : index
    %233 = vector.load %arg5[%c2_129, %c0_130] : memref<24x128xf32, #tpu.memory_space<vmem>>, vector<16x128xf32>
    %c3_131 = arith.constant 3 : index
    %c0_132 = arith.constant 0 : index
    %234 = vector.load %arg5[%c3_131, %c0_132] : memref<24x128xf32, #tpu.memory_space<vmem>>, vector<16x128xf32>
    %c4_133 = arith.constant 4 : index
    %c0_134 = arith.constant 0 : index
    %235 = vector.load %arg5[%c4_133, %c0_134] : memref<24x128xf32, #tpu.memory_space<vmem>>, vector<16x128xf32>
    %c5_135 = arith.constant 5 : index
    %c0_136 = arith.constant 0 : index
    %236 = vector.load %arg5[%c5_135, %c0_136] : memref<24x128xf32, #tpu.memory_space<vmem>>, vector<16x128xf32>
    %c6_137 = arith.constant 6 : index
    %c0_138 = arith.constant 0 : index
    %237 = vector.load %arg5[%c6_137, %c0_138] : memref<24x128xf32, #tpu.memory_space<vmem>>, vector<16x128xf32>
    %cst_139 = arith.constant 0.000000e+00 : f32
    %238 = vector.broadcast %cst_139 : f32 to vector<16x128xf32>
    %c0_140 = arith.constant 0 : index
    %c0_141 = arith.constant 0 : index
    %239 = memref.load %arg2[%c0_140, %c0_141] : memref<7x7xf32, #tpu.memory_space<smem>>
    %240 = vector.broadcast %239 : f32 to vector<16x128xf32>
    %241 = arith.mulf %231, %240 : vector<16x128xf32>
    %c1_142 = arith.constant 1 : index
    %c0_143 = arith.constant 0 : index
    %242 = memref.load %arg2[%c1_142, %c0_143] : memref<7x7xf32, #tpu.memory_space<smem>>
    %243 = vector.broadcast %242 : f32 to vector<16x128xf32>
    %244 = arith.mulf %232, %243 : vector<16x128xf32>
    %245 = arith.addf %241, %244 : vector<16x128xf32>
    %c2_144 = arith.constant 2 : index
    %c0_145 = arith.constant 0 : index
    %246 = memref.load %arg2[%c2_144, %c0_145] : memref<7x7xf32, #tpu.memory_space<smem>>
    %247 = vector.broadcast %246 : f32 to vector<16x128xf32>
    %248 = arith.mulf %233, %247 : vector<16x128xf32>
    %249 = arith.addf %245, %248 : vector<16x128xf32>
    %c3_146 = arith.constant 3 : index
    %c0_147 = arith.constant 0 : index
    %250 = memref.load %arg2[%c3_146, %c0_147] : memref<7x7xf32, #tpu.memory_space<smem>>
    %251 = vector.broadcast %250 : f32 to vector<16x128xf32>
    %252 = arith.mulf %234, %251 : vector<16x128xf32>
    %253 = arith.addf %249, %252 : vector<16x128xf32>
    %c4_148 = arith.constant 4 : index
    %c0_149 = arith.constant 0 : index
    %254 = memref.load %arg2[%c4_148, %c0_149] : memref<7x7xf32, #tpu.memory_space<smem>>
    %255 = vector.broadcast %254 : f32 to vector<16x128xf32>
    %256 = arith.mulf %235, %255 : vector<16x128xf32>
    %257 = arith.addf %253, %256 : vector<16x128xf32>
    %c5_150 = arith.constant 5 : index
    %c0_151 = arith.constant 0 : index
    %258 = memref.load %arg2[%c5_150, %c0_151] : memref<7x7xf32, #tpu.memory_space<smem>>
    %259 = vector.broadcast %258 : f32 to vector<16x128xf32>
    %260 = arith.mulf %236, %259 : vector<16x128xf32>
    %261 = arith.addf %257, %260 : vector<16x128xf32>
    %c6_152 = arith.constant 6 : index
    %c0_153 = arith.constant 0 : index
    %262 = memref.load %arg2[%c6_152, %c0_153] : memref<7x7xf32, #tpu.memory_space<smem>>
    %263 = vector.broadcast %262 : f32 to vector<16x128xf32>
    %264 = arith.mulf %237, %263 : vector<16x128xf32>
    %265 = arith.addf %261, %264 : vector<16x128xf32>
    %c3_i32_154 = arith.constant 3 : i32
    %266 = tpu.dynamic_rotate %265 by %c3_i32_154 dim 1 : vector<16x128xf32>, i32 -> vector<16x128xf32>
    %267 = arith.addf %238, %266 : vector<16x128xf32>
    %c0_155 = arith.constant 0 : index
    %c1_156 = arith.constant 1 : index
    %268 = memref.load %arg2[%c0_155, %c1_156] : memref<7x7xf32, #tpu.memory_space<smem>>
    %269 = vector.broadcast %268 : f32 to vector<16x128xf32>
    %270 = arith.mulf %231, %269 : vector<16x128xf32>
    %c1_157 = arith.constant 1 : index
    %c1_158 = arith.constant 1 : index
    %271 = memref.load %arg2[%c1_157, %c1_158] : memref<7x7xf32, #tpu.memory_space<smem>>
    %272 = vector.broadcast %271 : f32 to vector<16x128xf32>
    %273 = arith.mulf %232, %272 : vector<16x128xf32>
    %274 = arith.addf %270, %273 : vector<16x128xf32>
    %c2_159 = arith.constant 2 : index
    %c1_160 = arith.constant 1 : index
    %275 = memref.load %arg2[%c2_159, %c1_160] : memref<7x7xf32, #tpu.memory_space<smem>>
    %276 = vector.broadcast %275 : f32 to vector<16x128xf32>
    %277 = arith.mulf %233, %276 : vector<16x128xf32>
    %278 = arith.addf %274, %277 : vector<16x128xf32>
    %c3_161 = arith.constant 3 : index
    %c1_162 = arith.constant 1 : index
    %279 = memref.load %arg2[%c3_161, %c1_162] : memref<7x7xf32, #tpu.memory_space<smem>>
    %280 = vector.broadcast %279 : f32 to vector<16x128xf32>
    %281 = arith.mulf %234, %280 : vector<16x128xf32>
    %282 = arith.addf %278, %281 : vector<16x128xf32>
    %c4_163 = arith.constant 4 : index
    %c1_164 = arith.constant 1 : index
    %283 = memref.load %arg2[%c4_163, %c1_164] : memref<7x7xf32, #tpu.memory_space<smem>>
    %284 = vector.broadcast %283 : f32 to vector<16x128xf32>
    %285 = arith.mulf %235, %284 : vector<16x128xf32>
    %286 = arith.addf %282, %285 : vector<16x128xf32>
    %c5_165 = arith.constant 5 : index
    %c1_166 = arith.constant 1 : index
    %287 = memref.load %arg2[%c5_165, %c1_166] : memref<7x7xf32, #tpu.memory_space<smem>>
    %288 = vector.broadcast %287 : f32 to vector<16x128xf32>
    %289 = arith.mulf %236, %288 : vector<16x128xf32>
    %290 = arith.addf %286, %289 : vector<16x128xf32>
    %c6_167 = arith.constant 6 : index
    %c1_168 = arith.constant 1 : index
    %291 = memref.load %arg2[%c6_167, %c1_168] : memref<7x7xf32, #tpu.memory_space<smem>>
    %292 = vector.broadcast %291 : f32 to vector<16x128xf32>
    %293 = arith.mulf %237, %292 : vector<16x128xf32>
    %294 = arith.addf %290, %293 : vector<16x128xf32>
    %c2_i32_169 = arith.constant 2 : i32
    %295 = tpu.dynamic_rotate %294 by %c2_i32_169 dim 1 : vector<16x128xf32>, i32 -> vector<16x128xf32>
    %296 = arith.addf %267, %295 : vector<16x128xf32>
    %c0_170 = arith.constant 0 : index
    %c2_171 = arith.constant 2 : index
    %297 = memref.load %arg2[%c0_170, %c2_171] : memref<7x7xf32, #tpu.memory_space<smem>>
    %298 = vector.broadcast %297 : f32 to vector<16x128xf32>
    %299 = arith.mulf %231, %298 : vector<16x128xf32>
    %c1_172 = arith.constant 1 : index
    %c2_173 = arith.constant 2 : index
    %300 = memref.load %arg2[%c1_172, %c2_173] : memref<7x7xf32, #tpu.memory_space<smem>>
    %301 = vector.broadcast %300 : f32 to vector<16x128xf32>
    %302 = arith.mulf %232, %301 : vector<16x128xf32>
    %303 = arith.addf %299, %302 : vector<16x128xf32>
    %c2_174 = arith.constant 2 : index
    %c2_175 = arith.constant 2 : index
    %304 = memref.load %arg2[%c2_174, %c2_175] : memref<7x7xf32, #tpu.memory_space<smem>>
    %305 = vector.broadcast %304 : f32 to vector<16x128xf32>
    %306 = arith.mulf %233, %305 : vector<16x128xf32>
    %307 = arith.addf %303, %306 : vector<16x128xf32>
    %c3_176 = arith.constant 3 : index
    %c2_177 = arith.constant 2 : index
    %308 = memref.load %arg2[%c3_176, %c2_177] : memref<7x7xf32, #tpu.memory_space<smem>>
    %309 = vector.broadcast %308 : f32 to vector<16x128xf32>
    %310 = arith.mulf %234, %309 : vector<16x128xf32>
    %311 = arith.addf %307, %310 : vector<16x128xf32>
    %c4_178 = arith.constant 4 : index
    %c2_179 = arith.constant 2 : index
    %312 = memref.load %arg2[%c4_178, %c2_179] : memref<7x7xf32, #tpu.memory_space<smem>>
    %313 = vector.broadcast %312 : f32 to vector<16x128xf32>
    %314 = arith.mulf %235, %313 : vector<16x128xf32>
    %315 = arith.addf %311, %314 : vector<16x128xf32>
    %c5_180 = arith.constant 5 : index
    %c2_181 = arith.constant 2 : index
    %316 = memref.load %arg2[%c5_180, %c2_181] : memref<7x7xf32, #tpu.memory_space<smem>>
    %317 = vector.broadcast %316 : f32 to vector<16x128xf32>
    %318 = arith.mulf %236, %317 : vector<16x128xf32>
    %319 = arith.addf %315, %318 : vector<16x128xf32>
    %c6_182 = arith.constant 6 : index
    %c2_183 = arith.constant 2 : index
    %320 = memref.load %arg2[%c6_182, %c2_183] : memref<7x7xf32, #tpu.memory_space<smem>>
    %321 = vector.broadcast %320 : f32 to vector<16x128xf32>
    %322 = arith.mulf %237, %321 : vector<16x128xf32>
    %323 = arith.addf %319, %322 : vector<16x128xf32>
    %c1_i32_184 = arith.constant 1 : i32
    %324 = tpu.dynamic_rotate %323 by %c1_i32_184 dim 1 : vector<16x128xf32>, i32 -> vector<16x128xf32>
    %325 = arith.addf %296, %324 : vector<16x128xf32>
    %c0_185 = arith.constant 0 : index
    %c3_186 = arith.constant 3 : index
    %326 = memref.load %arg2[%c0_185, %c3_186] : memref<7x7xf32, #tpu.memory_space<smem>>
    %327 = vector.broadcast %326 : f32 to vector<16x128xf32>
    %328 = arith.mulf %231, %327 : vector<16x128xf32>
    %c1_187 = arith.constant 1 : index
    %c3_188 = arith.constant 3 : index
    %329 = memref.load %arg2[%c1_187, %c3_188] : memref<7x7xf32, #tpu.memory_space<smem>>
    %330 = vector.broadcast %329 : f32 to vector<16x128xf32>
    %331 = arith.mulf %232, %330 : vector<16x128xf32>
    %332 = arith.addf %328, %331 : vector<16x128xf32>
    %c2_189 = arith.constant 2 : index
    %c3_190 = arith.constant 3 : index
    %333 = memref.load %arg2[%c2_189, %c3_190] : memref<7x7xf32, #tpu.memory_space<smem>>
    %334 = vector.broadcast %333 : f32 to vector<16x128xf32>
    %335 = arith.mulf %233, %334 : vector<16x128xf32>
    %336 = arith.addf %332, %335 : vector<16x128xf32>
    %c3_191 = arith.constant 3 : index
    %c3_192 = arith.constant 3 : index
    %337 = memref.load %arg2[%c3_191, %c3_192] : memref<7x7xf32, #tpu.memory_space<smem>>
    %338 = vector.broadcast %337 : f32 to vector<16x128xf32>
    %339 = arith.mulf %234, %338 : vector<16x128xf32>
    %340 = arith.addf %336, %339 : vector<16x128xf32>
    %c4_193 = arith.constant 4 : index
    %c3_194 = arith.constant 3 : index
    %341 = memref.load %arg2[%c4_193, %c3_194] : memref<7x7xf32, #tpu.memory_space<smem>>
    %342 = vector.broadcast %341 : f32 to vector<16x128xf32>
    %343 = arith.mulf %235, %342 : vector<16x128xf32>
    %344 = arith.addf %340, %343 : vector<16x128xf32>
    %c5_195 = arith.constant 5 : index
    %c3_196 = arith.constant 3 : index
    %345 = memref.load %arg2[%c5_195, %c3_196] : memref<7x7xf32, #tpu.memory_space<smem>>
    %346 = vector.broadcast %345 : f32 to vector<16x128xf32>
    %347 = arith.mulf %236, %346 : vector<16x128xf32>
    %348 = arith.addf %344, %347 : vector<16x128xf32>
    %c6_197 = arith.constant 6 : index
    %c3_198 = arith.constant 3 : index
    %349 = memref.load %arg2[%c6_197, %c3_198] : memref<7x7xf32, #tpu.memory_space<smem>>
    %350 = vector.broadcast %349 : f32 to vector<16x128xf32>
    %351 = arith.mulf %237, %350 : vector<16x128xf32>
    %352 = arith.addf %348, %351 : vector<16x128xf32>
    %353 = arith.addf %325, %352 : vector<16x128xf32>
    %c0_199 = arith.constant 0 : index
    %c4_200 = arith.constant 4 : index
    %354 = memref.load %arg2[%c0_199, %c4_200] : memref<7x7xf32, #tpu.memory_space<smem>>
    %355 = vector.broadcast %354 : f32 to vector<16x128xf32>
    %356 = arith.mulf %231, %355 : vector<16x128xf32>
    %c1_201 = arith.constant 1 : index
    %c4_202 = arith.constant 4 : index
    %357 = memref.load %arg2[%c1_201, %c4_202] : memref<7x7xf32, #tpu.memory_space<smem>>
    %358 = vector.broadcast %357 : f32 to vector<16x128xf32>
    %359 = arith.mulf %232, %358 : vector<16x128xf32>
    %360 = arith.addf %356, %359 : vector<16x128xf32>
    %c2_203 = arith.constant 2 : index
    %c4_204 = arith.constant 4 : index
    %361 = memref.load %arg2[%c2_203, %c4_204] : memref<7x7xf32, #tpu.memory_space<smem>>
    %362 = vector.broadcast %361 : f32 to vector<16x128xf32>
    %363 = arith.mulf %233, %362 : vector<16x128xf32>
    %364 = arith.addf %360, %363 : vector<16x128xf32>
    %c3_205 = arith.constant 3 : index
    %c4_206 = arith.constant 4 : index
    %365 = memref.load %arg2[%c3_205, %c4_206] : memref<7x7xf32, #tpu.memory_space<smem>>
    %366 = vector.broadcast %365 : f32 to vector<16x128xf32>
    %367 = arith.mulf %234, %366 : vector<16x128xf32>
    %368 = arith.addf %364, %367 : vector<16x128xf32>
    %c4_207 = arith.constant 4 : index
    %c4_208 = arith.constant 4 : index
    %369 = memref.load %arg2[%c4_207, %c4_208] : memref<7x7xf32, #tpu.memory_space<smem>>
    %370 = vector.broadcast %369 : f32 to vector<16x128xf32>
    %371 = arith.mulf %235, %370 : vector<16x128xf32>
    %372 = arith.addf %368, %371 : vector<16x128xf32>
    %c5_209 = arith.constant 5 : index
    %c4_210 = arith.constant 4 : index
    %373 = memref.load %arg2[%c5_209, %c4_210] : memref<7x7xf32, #tpu.memory_space<smem>>
    %374 = vector.broadcast %373 : f32 to vector<16x128xf32>
    %375 = arith.mulf %236, %374 : vector<16x128xf32>
    %376 = arith.addf %372, %375 : vector<16x128xf32>
    %c6_211 = arith.constant 6 : index
    %c4_212 = arith.constant 4 : index
    %377 = memref.load %arg2[%c6_211, %c4_212] : memref<7x7xf32, #tpu.memory_space<smem>>
    %378 = vector.broadcast %377 : f32 to vector<16x128xf32>
    %379 = arith.mulf %237, %378 : vector<16x128xf32>
    %380 = arith.addf %376, %379 : vector<16x128xf32>
    %c127_i32_213 = arith.constant 127 : i32
    %381 = tpu.dynamic_rotate %380 by %c127_i32_213 dim 1 : vector<16x128xf32>, i32 -> vector<16x128xf32>
    %382 = arith.addf %353, %381 : vector<16x128xf32>
    %c0_214 = arith.constant 0 : index
    %c5_215 = arith.constant 5 : index
    %383 = memref.load %arg2[%c0_214, %c5_215] : memref<7x7xf32, #tpu.memory_space<smem>>
    %384 = vector.broadcast %383 : f32 to vector<16x128xf32>
    %385 = arith.mulf %231, %384 : vector<16x128xf32>
    %c1_216 = arith.constant 1 : index
    %c5_217 = arith.constant 5 : index
    %386 = memref.load %arg2[%c1_216, %c5_217] : memref<7x7xf32, #tpu.memory_space<smem>>
    %387 = vector.broadcast %386 : f32 to vector<16x128xf32>
    %388 = arith.mulf %232, %387 : vector<16x128xf32>
    %389 = arith.addf %385, %388 : vector<16x128xf32>
    %c2_218 = arith.constant 2 : index
    %c5_219 = arith.constant 5 : index
    %390 = memref.load %arg2[%c2_218, %c5_219] : memref<7x7xf32, #tpu.memory_space<smem>>
    %391 = vector.broadcast %390 : f32 to vector<16x128xf32>
    %392 = arith.mulf %233, %391 : vector<16x128xf32>
    %393 = arith.addf %389, %392 : vector<16x128xf32>
    %c3_220 = arith.constant 3 : index
    %c5_221 = arith.constant 5 : index
    %394 = memref.load %arg2[%c3_220, %c5_221] : memref<7x7xf32, #tpu.memory_space<smem>>
    %395 = vector.broadcast %394 : f32 to vector<16x128xf32>
    %396 = arith.mulf %234, %395 : vector<16x128xf32>
    %397 = arith.addf %393, %396 : vector<16x128xf32>
    %c4_222 = arith.constant 4 : index
    %c5_223 = arith.constant 5 : index
    %398 = memref.load %arg2[%c4_222, %c5_223] : memref<7x7xf32, #tpu.memory_space<smem>>
    %399 = vector.broadcast %398 : f32 to vector<16x128xf32>
    %400 = arith.mulf %235, %399 : vector<16x128xf32>
    %401 = arith.addf %397, %400 : vector<16x128xf32>
    %c5_224 = arith.constant 5 : index
    %c5_225 = arith.constant 5 : index
    %402 = memref.load %arg2[%c5_224, %c5_225] : memref<7x7xf32, #tpu.memory_space<smem>>
    %403 = vector.broadcast %402 : f32 to vector<16x128xf32>
    %404 = arith.mulf %236, %403 : vector<16x128xf32>
    %405 = arith.addf %401, %404 : vector<16x128xf32>
    %c6_226 = arith.constant 6 : index
    %c5_227 = arith.constant 5 : index
    %406 = memref.load %arg2[%c6_226, %c5_227] : memref<7x7xf32, #tpu.memory_space<smem>>
    %407 = vector.broadcast %406 : f32 to vector<16x128xf32>
    %408 = arith.mulf %237, %407 : vector<16x128xf32>
    %409 = arith.addf %405, %408 : vector<16x128xf32>
    %c126_i32_228 = arith.constant 126 : i32
    %410 = tpu.dynamic_rotate %409 by %c126_i32_228 dim 1 : vector<16x128xf32>, i32 -> vector<16x128xf32>
    %411 = arith.addf %382, %410 : vector<16x128xf32>
    %c0_229 = arith.constant 0 : index
    %c6_230 = arith.constant 6 : index
    %412 = memref.load %arg2[%c0_229, %c6_230] : memref<7x7xf32, #tpu.memory_space<smem>>
    %413 = vector.broadcast %412 : f32 to vector<16x128xf32>
    %414 = arith.mulf %231, %413 : vector<16x128xf32>
    %c1_231 = arith.constant 1 : index
    %c6_232 = arith.constant 6 : index
    %415 = memref.load %arg2[%c1_231, %c6_232] : memref<7x7xf32, #tpu.memory_space<smem>>
    %416 = vector.broadcast %415 : f32 to vector<16x128xf32>
    %417 = arith.mulf %232, %416 : vector<16x128xf32>
    %418 = arith.addf %414, %417 : vector<16x128xf32>
    %c2_233 = arith.constant 2 : index
    %c6_234 = arith.constant 6 : index
    %419 = memref.load %arg2[%c2_233, %c6_234] : memref<7x7xf32, #tpu.memory_space<smem>>
    %420 = vector.broadcast %419 : f32 to vector<16x128xf32>
    %421 = arith.mulf %233, %420 : vector<16x128xf32>
    %422 = arith.addf %418, %421 : vector<16x128xf32>
    %c3_235 = arith.constant 3 : index
    %c6_236 = arith.constant 6 : index
    %423 = memref.load %arg2[%c3_235, %c6_236] : memref<7x7xf32, #tpu.memory_space<smem>>
    %424 = vector.broadcast %423 : f32 to vector<16x128xf32>
    %425 = arith.mulf %234, %424 : vector<16x128xf32>
    %426 = arith.addf %422, %425 : vector<16x128xf32>
    %c4_237 = arith.constant 4 : index
    %c6_238 = arith.constant 6 : index
    %427 = memref.load %arg2[%c4_237, %c6_238] : memref<7x7xf32, #tpu.memory_space<smem>>
    %428 = vector.broadcast %427 : f32 to vector<16x128xf32>
    %429 = arith.mulf %235, %428 : vector<16x128xf32>
    %430 = arith.addf %426, %429 : vector<16x128xf32>
    %c5_239 = arith.constant 5 : index
    %c6_240 = arith.constant 6 : index
    %431 = memref.load %arg2[%c5_239, %c6_240] : memref<7x7xf32, #tpu.memory_space<smem>>
    %432 = vector.broadcast %431 : f32 to vector<16x128xf32>
    %433 = arith.mulf %236, %432 : vector<16x128xf32>
    %434 = arith.addf %430, %433 : vector<16x128xf32>
    %c6_241 = arith.constant 6 : index
    %c6_242 = arith.constant 6 : index
    %435 = memref.load %arg2[%c6_241, %c6_242] : memref<7x7xf32, #tpu.memory_space<smem>>
    %436 = vector.broadcast %435 : f32 to vector<16x128xf32>
    %437 = arith.mulf %237, %436 : vector<16x128xf32>
    %438 = arith.addf %434, %437 : vector<16x128xf32>
    %c125_i32_243 = arith.constant 125 : i32
    %439 = tpu.dynamic_rotate %438 by %c125_i32_243 dim 1 : vector<16x128xf32>, i32 -> vector<16x128xf32>
    %440 = arith.addf %411, %439 : vector<16x128xf32>
    %441 = vector.extract_strided_slice %440 {offsets = [0, 0], sizes = [16, 16], strides = [1, 1]} : vector<16x128xf32> to vector<16x16xf32>
    %442 = arith.negf %441 : vector<16x16xf32>
    %443 = math.exp %442 : vector<16x16xf32>
    %cst_244 = arith.constant 1.000000e+00 : f32
    %444 = vector.broadcast %cst_244 : f32 to vector<16x16xf32>
    %445 = arith.addf %444, %443 : vector<16x16xf32>
    %446 = arith.divf %444, %445 : vector<16x16xf32>
    %c1_245 = arith.constant 1 : index
    %c0_246 = arith.constant 0 : index
    %c0_247 = arith.constant 0 : index
    %c0_248 = arith.constant 0 : index
    %447 = vector.load %arg4[%c1_245, %c0_246, %c0_247, %c0_248] : memref<2x1x16x16xf32, #tpu.memory_space<vmem>>, vector<1x1x16x16xf32>
    %448 = vector.shape_cast %447 : vector<1x1x16x16xf32> to vector<16x16xf32>
    %449 = vector.shape_cast %446 : vector<16x16xf32> to vector<1x1x16x16xf32>
    tpu.vector_store %arg4[%c1_245, %c0_246, %c0_247, %c0_248], %449 {strides = array<i32>} : memref<2x1x16x16xf32, #tpu.memory_space<vmem>>, vector<1x1x16x16xf32>,
    return
  }
  func.func @transform_0(%arg0: i32, %arg1: i32) -> (i32, i32) {
    %c0_i32 = arith.constant 0 : i32
    %c0_i32_0 = arith.constant 0 : i32
    %c0_i32_1 = arith.constant 0 : i32
    return %c0_i32, %c0_i32_0 : i32, i32
  }
  func.func @transform_1(%arg0: i32, %arg1: i32) -> (i32, i32, i32, i32) {
    %c0_i32 = arith.constant 0 : i32
    %c0_i32_0 = arith.constant 0 : i32
    %c0_i32_1 = arith.constant 0 : i32
    return %arg0, %arg1, %c0_i32, %c0_i32_0 : i32, i32, i32, i32
  }
  func.func @transform_2(%arg0: i32, %arg1: i32) -> (i32, i32, i32, i32) {
    %c0_i32 = arith.constant 0 : i32
    %c0_i32_0 = arith.constant 0 : i32
    %c0_i32_1 = arith.constant 0 : i32
    %c0_i32_2 = arith.constant 0 : i32
    return %arg0, %c0_i32, %c0_i32_0, %c0_i32_1 : i32, i32, i32, i32
  }
}

</mosaic_0001>

<llo_original>
// kernel: tpu_custom_call.1
$region0: #{tpu_custom_call.1}
  #allocation0 [shape = 'u32[]', space=smem, size = 0x4, offset = 0x4, fixed_abs, tag = 'smem constant byte address 0x4 - core index']
  #allocation1 [shape = 'u32[72,128]{1,0:T(1,128)}', space=vmem, size = 0x9000, scoped, tag = 'internal scratch']
  #allocation2 [shape = 'f32[24,128]{1,0:T(8,128)}', space=vmem, size = 0x3000, scoped, tag = 'scratch operand']
  %s0 = inlined_call_operand.hbm [shape: f32[7,7], index: 0, kind: input, shape index: {}]
  %s1 = inlined_call_operand.hbm [shape: f32[2,4,16,16], index: 1, kind: input, shape index: {}]
  %s2 = inlined_call_operand.hbm [shape: f32[2,1,16,16], index: 2, kind: output, shape index: {}]
  %s3 = sld [smem:[#allocation0]]
  $region26: #{tpu_custom_call.1} parent=0
    _
  %s5 = ssub.s32 1, %s3
  %s6 = scalar_select 0, %s5, %s3
  $region1: #{tpu_custom_call.1} parent=0
    #allocation3 [shape = 'u8[4096]{0}', space=smem, size = 0x1000, scoped, tag = 'input window, operand 0, single buffered']
    #allocation4 [shape = 's32[1]{0}', space=sflag, size = 0x4, scoped, tag = 'scoped memory for tpu_custom_call.1']
    #allocation5 [shape = 's32[1]{0}', space=sflag, size = 0x4, scoped, tag = 'scoped memory for tpu_custom_call.1']
    #allocation6 [shape = 's32[1]{0}', space=sflag, size = 0x4, scoped, tag = 'scoped memory for tpu_custom_call.1']
    #allocation7 [shape = 'u8[65536]{0}', space=vmem, size = 0x10000, scoped, tag = 'input window, operand 1, single buffered']
    #allocation8 [shape = 'u8[16384]{0}', space=vmem, size = 0x4000, scoped, tag = 'output window, operand 0, single buffered']
    %7 = vsyncpa [#allocation6], 0
    %8 = vsyncpa [#allocation4], 0
    %9 = vsyncpa [#allocation5], 0
    // Predicated region
    $region2: #{tpu_custom_call.1} parent=1 // pred_check
      _
    $region3: #{tpu_custom_call.1} parent=1 // pred_check_branch
      %11 = sbr.rel (0) target = $region5
    $region4: #{tpu_custom_call.1} parent=1 // pred_region
      %13 = vsyncadd [#allocation6], 0
      %s15 = sshll.u32 %s0, 4
      %s16 = int_to_ptr.hbm [resolvable:$true] %s15
      %18 = dma.hbm_to_smem %s16, 128, [#allocation3], [#allocation6]
    $region5: #{tpu_custom_call.1} parent=1 // pred_fallthru
      _
    // Predicated region
    $region6: #{tpu_custom_call.1} parent=1 // pred_check
      _
    $region7: #{tpu_custom_call.1} parent=1 // pred_check_branch
      %20 = sbr.rel (0) target = $region9
    $region8: #{tpu_custom_call.1} parent=1 // pred_region
      %22 = vsyncadd [#allocation4], 0
      %s23 = sshll.u32 %s1, 4
      %s24 = int_to_ptr.hbm [resolvable:$true] %s23
      %s25 = sshll.u32 [#allocation7], 4
      %s26 = int_to_ptr.vmem [resolvable:$true] %s25
      %31 = dma.hbm_to_vmem [thread:$0]  %s24, 2048, %s26, [#allocation4], 128, 128, 8
    $region9: #{tpu_custom_call.1} parent=1 // pred_fallthru
      _
    // Predicated region
    $region10: #{tpu_custom_call.1} parent=1 // pred_check
      _
    $region11: #{tpu_custom_call.1} parent=1 // pred_check_branch
      %33 = sbr.rel (0) target = $region13
    $region12: #{tpu_custom_call.1} parent=1 // pred_region
      %35 = dma.done [#allocation6], 128
    $region13: #{tpu_custom_call.1} parent=1 // pred_fallthru
      _
    // Predicated region
    $region14: #{tpu_custom_call.1} parent=1 // pred_check
      _
    $region15: #{tpu_custom_call.1} parent=1 // pred_check_branch
      %37 = sbr.rel (0) target = $region17
    $region16: #{tpu_custom_call.1} parent=1 // pred_region
      %39 = dma.done [#allocation4], 2048
    $region17: #{tpu_custom_call.1} parent=1 // pred_fallthru
      _
    %40 = sfence
    %v41 = vld [vmem:[#allocation7] sm:$0xff]
    %v42 = vld [vmem:[#allocation7 + $0x8] sm:$0xff]
    %v43 = vld [vmem:[#allocation7 + $0x10] sm:$0xff]
    %v44 = vld [vmem:[#allocation7 + $0x18] sm:$0xff]
    %v45 = vld [vmem:[#allocation7 + $0x20] sm:$0xff]
    %v46 = vld [vmem:[#allocation7 + $0x28] sm:$0xff]
    %v47 = vld [vmem:[#allocation7 + $0x30] sm:$0xff]
    %v48 = vld [vmem:[#allocation7 + $0x38] sm:$0xff]
    %v49 = vld [vmem:[#allocation7 + $0x40] sm:$0xff]
    %v50 = vld [vmem:[#allocation7 + $0x48] sm:$0xff]
    %v51 = vld [vmem:[#allocation7 + $0x50] sm:$0xff]
    %v52 = vld [vmem:[#allocation7 + $0x58] sm:$0xff]
    %v53 = vld [vmem:[#allocation7 + $0x60] sm:$0xff]
    %v54 = vld [vmem:[#allocation7 + $0x68] sm:$0xff]
    %v55 = vld [vmem:[#allocation7 + $0x70] sm:$0xff]
    %v56 = vld [vmem:[#allocation7 + $0x78] sm:$0xff]
    %vm57 = vcmask 130048
    %v58 = vsel %vm57, %v41, -inf
    %v59 = vsel %vm57, %v43, -inf
    %v60 = vmax.f32 %v58, %v59
    %v61 = vsel %vm57, %v45, -inf
    %v62 = vmax.f32 %v60, %v61
    %v63 = vsel %vm57, %v47, -inf
    %v64 = vmax.f32 %v62, %v63
    %v65 = vsel %vm57, %v42, -inf
    %v66 = vsel %vm57, %v44, -inf
    %v67 = vmax.f32 %v65, %v66
    %v68 = vsel %vm57, %v46, -inf
    %v69 = vmax.f32 %v67, %v68
    %v70 = vsel %vm57, %v48, -inf
    %v71 = vmax.f32 %v69, %v70
    %v72 = vsel %vm57, %v49, -inf
    %v73 = vsel %vm57, %v51, -inf
    %v74 = vmax.f32 %v72, %v73
    %v75 = vsel %vm57, %v53, -inf
    %v76 = vmax.f32 %v74, %v75
    %v77 = vsel %vm57, %v55, -inf
    %v78 = vmax.f32 %v76, %v77
    %v79 = vsel %vm57, %v50, -inf
    %v80 = vsel %vm57, %v52, -inf
    %v81 = vmax.f32 %v79, %v80
    %v82 = vsel %vm57, %v54, -inf
    %v83 = vmax.f32 %v81, %v82
    %v84 = vsel %vm57, %v56, -inf
    %v85 = vmax.f32 %v83, %v84
    %86 = vst [vmem:[#allocation2] sm:$0xff] 0.0
    %87 = vst [vmem:[#allocation2 + $0x8] sm:$0xff] 0.0
    %88 = vst [vmem:[#allocation2 + $0x10] sm:$0xff] 0.0
    %89 = vst.msk [vmem:[#allocation2 + $0x3] sm:$0xff] %vm57, %v64
    %90 = vst.msk [vmem:[#allocation2 + $0xb] sm:$0xff] %vm57, %v71
    %v91 = vld [vmem:[#allocation2] sm:$0xff]
    %v92 = vld [vmem:[#allocation2 + $0x8] sm:$0xff]
    %v93 = vld [vmem:[#allocation2 + $0x1] sm:$0xff]
    %v94 = vld [vmem:[#allocation2 + $0x9] sm:$0xff]
    %v95 = vld [vmem:[#allocation2 + $0x2] sm:$0xff]
    %v96 = vld [vmem:[#allocation2 + $0xa] sm:$0xff]
    %v97 = vld [vmem:[#allocation2 + $0x3] sm:$0xff]
    %v98 = vld [vmem:[#allocation2 + $0xb] sm:$0xff]
    %v99 = vld [vmem:[#allocation2 + $0x4] sm:$0xff]
    %v100 = vld [vmem:[#allocation2 + $0xc] sm:$0xff]
    %v101 = vld [vmem:[#allocation2 + $0x5] sm:$0xff]
    %v102 = vld [vmem:[#allocation2 + $0xd] sm:$0xff]
    %v103 = vld [vmem:[#allocation2 + $0x6] sm:$0xff]
    %v104 = vld [vmem:[#allocation2 + $0xe] sm:$0xff]
    %s105 = sld [smem:[#allocation3]]
    %v106 = vstv %s105
    %v107 = vmul.f32 %v91, %v106
    %v108 = vmul.f32 %v92, %v106
    %s109 = sld [smem:[#allocation3 + $0x80]]
    %v110 = vstv %s109
    %v111 = vmul.f32 %v93, %v110
    %v112 = vmul.f32 %v94, %v110
    %v113 = vadd.f32 %v107, %v111
    %v114 = vadd.f32 %v108, %v112
    %s115 = sld [smem:[#allocation3 + $0x100]]
    %v116 = vstv %s115
    %v117 = vmul.f32 %v95, %v116
    %v118 = vmul.f32 %v96, %v116
    %v119 = vadd.f32 %v113, %v117
    %v120 = vadd.f32 %v114, %v118
    %s121 = sld [smem:[#allocation3 + $0x180]]
    %v122 = vstv %s121
    %v123 = vmul.f32 %v97, %v122
    %v124 = vmul.f32 %v98, %v122
    %v125 = vadd.f32 %v119, %v123
    %v126 = vadd.f32 %v120, %v124
    %s127 = sld [smem:[#allocation3 + $0x200]]
    %v128 = vstv %s127
    %v129 = vmul.f32 %v99, %v128
    %v130 = vmul.f32 %v100, %v128
    %v131 = vadd.f32 %v125, %v129
    %v132 = vadd.f32 %v126, %v130
    %s133 = sld [smem:[#allocation3 + $0x280]]
    %v134 = vstv %s133
    %v135 = vmul.f32 %v101, %v134
    %v136 = vmul.f32 %v102, %v134
    %v137 = vadd.f32 %v131, %v135
    %v138 = vadd.f32 %v132, %v136
    %s139 = sld [smem:[#allocation3 + $0x300]]
    %v140 = vstv %s139
    %v141 = vmul.f32 %v103, %v140
    %v142 = vmul.f32 %v104, %v140
    %v143 = vadd.f32 %v137, %v141
    %v144 = vadd.f32 %v138, %v142
    %145 = vrot.lane.b32.xlu0 %v143, 3
    %v146 = vpop.permute.xlu0 %145
    %147 = vrot.lane.b32.xlu0 %v144, 3
    %v148 = vpop.permute.xlu0 %147
    %v149 = vadd.f32 %v146, 0.0
    %v150 = vadd.f32 %v148, 0.0
    %s151 = sld [smem:[#allocation3 + $0x1]]
    %v152 = vstv %s151
    %v153 = vmul.f32 %v91, %v152
    %v154 = vmul.f32 %v92, %v152
    %s155 = sld [smem:[#allocation3 + $0x81]]
    %v156 = vstv %s155
    %v157 = vmul.f32 %v93, %v156
    %v158 = vmul.f32 %v94, %v156
    %v159 = vadd.f32 %v153, %v157
    %v160 = vadd.f32 %v154, %v158
    %s161 = sld [smem:[#allocation3 + $0x101]]
    %v162 = vstv %s161
    %v163 = vmul.f32 %v95, %v162
    %v164 = vmul.f32 %v96, %v162
    %v165 = vadd.f32 %v159, %v163
    %v166 = vadd.f32 %v160, %v164
    %s167 = sld [smem:[#allocation3 + $0x181]]
    %v168 = vstv %s167
    %v169 = vmul.f32 %v97, %v168
    %v170 = vmul.f32 %v98, %v168
    %v171 = vadd.f32 %v165, %v169
    %v172 = vadd.f32 %v166, %v170
    %s173 = sld [smem:[#allocation3 + $0x201]]
    %v174 = vstv %s173
    %v175 = vmul.f32 %v99, %v174
    %v176 = vmul.f32 %v100, %v174
    %v177 = vadd.f32 %v171, %v175
    %v178 = vadd.f32 %v172, %v176
    %s179 = sld [smem:[#allocation3 + $0x281]]
    %v180 = vstv %s179
    %v181 = vmul.f32 %v101, %v180
    %v182 = vmul.f32 %v102, %v180
    %v183 = vadd.f32 %v177, %v181
    %v184 = vadd.f32 %v178, %v182
    %s185 = sld [smem:[#allocation3 + $0x301]]
    %v186 = vstv %s185
    %v187 = vmul.f32 %v103, %v186
    %v188 = vmul.f32 %v104, %v186
    %v189 = vadd.f32 %v183, %v187
    %v190 = vadd.f32 %v184, %v188
    %191 = vrot.lane.b32.xlu0 %v189, 2
    %v192 = vpop.permute.xlu0 %191
    %193 = vrot.lane.b32.xlu0 %v190, 2
    %v194 = vpop.permute.xlu0 %193
    %v195 = vadd.f32 %v149, %v192
    %v196 = vadd.f32 %v150, %v194
    %s197 = sld [smem:[#allocation3 + $0x2]]
    %v198 = vstv %s197
    %v199 = vmul.f32 %v91, %v198
    %v200 = vmul.f32 %v92, %v198
    %s201 = sld [smem:[#allocation3 + $0x82]]
    %v202 = vstv %s201
    %v203 = vmul.f32 %v93, %v202
    %v204 = vmul.f32 %v94, %v202
    %v205 = vadd.f32 %v199, %v203
    %v206 = vadd.f32 %v200, %v204
    %s207 = sld [smem:[#allocation3 + $0x102]]
    %v208 = vstv %s207
    %v209 = vmul.f32 %v95, %v208
    %v210 = vmul.f32 %v96, %v208
    %v211 = vadd.f32 %v205, %v209
    %v212 = vadd.f32 %v206, %v210
    %s213 = sld [smem:[#allocation3 + $0x182]]
    %v214 = vstv %s213
    %v215 = vmul.f32 %v97, %v214
    %v216 = vmul.f32 %v98, %v214
    %v217 = vadd.f32 %v211, %v215
    %v218 = vadd.f32 %v212, %v216
    %s219 = sld [smem:[#allocation3 + $0x202]]
    %v220 = vstv %s219
    %v221 = vmul.f32 %v99, %v220
    %v222 = vmul.f32 %v100, %v220
    %v223 = vadd.f32 %v217, %v221
    %v224 = vadd.f32 %v218, %v222
    %s225 = sld [smem:[#allocation3 + $0x282]]
    %v226 = vstv %s225
    %v227 = vmul.f32 %v101, %v226
    %v228 = vmul.f32 %v102, %v226
    %v229 = vadd.f32 %v223, %v227
    %v230 = vadd.f32 %v224, %v228
    %s231 = sld [smem:[#allocation3 + $0x302]]
    %v232 = vstv %s231
    %v233 = vmul.f32 %v103, %v232
    %v234 = vmul.f32 %v104, %v232
    %v235 = vadd.f32 %v229, %v233
    %v236 = vadd.f32 %v230, %v234
    %237 = vrot.lane.b32.xlu0 %v235, 1
    %v238 = vpop.permute.xlu0 %237
    %239 = vrot.lane.b32.xlu0 %v236, 1
    %v240 = vpop.permute.xlu0 %239
    %v241 = vadd.f32 %v195, %v238
    %v242 = vadd.f32 %v196, %v240
    %s243 = sld [smem:[#allocation3 + $0x3]]
    %v244 = vstv %s243
    %v245 = vmul.f32 %v91, %v244
    %v246 = vmul.f32 %v92, %v244
    %s247 = sld [smem:[#allocation3 + $0x83]]
    %v248 = vstv %s247
    %v249 = vmul.f32 %v93, %v248
    %v250 = vmul.f32 %v94, %v248
    %v251 = vadd.f32 %v245, %v249
    %v252 = vadd.f32 %v246, %v250
    %s253 = sld [smem:[#allocation3 + $0x103]]
    %v254 = vstv %s253
    %v255 = vmul.f32 %v95, %v254
    %v256 = vmul.f32 %v96, %v254
    %v257 = vadd.f32 %v251, %v255
    %v258 = vadd.f32 %v252, %v256
    %s259 = sld [smem:[#allocation3 + $0x183]]
    %v260 = vstv %s259
    %v261 = vmul.f32 %v97, %v260
    %v262 = vmul.f32 %v98, %v260
    %v263 = vadd.f32 %v257, %v261
    %v264 = vadd.f32 %v258, %v262
    %s265 = sld [smem:[#allocation3 + $0x203]]
    %v266 = vstv %s265
    %v267 = vmul.f32 %v99, %v266
    %v268 = vmul.f32 %v100, %v266
    %v269 = vadd.f32 %v263, %v267
    %v270 = vadd.f32 %v264, %v268
    %s271 = sld [smem:[#allocation3 + $0x283]]
    %v272 = vstv %s271
    %v273 = vmul.f32 %v101, %v272
    %v274 = vmul.f32 %v102, %v272
    %v275 = vadd.f32 %v269, %v273
    %v276 = vadd.f32 %v270, %v274
    %s277 = sld [smem:[#allocation3 + $0x303]]
    %v278 = vstv %s277
    %v279 = vmul.f32 %v103, %v278
    %v280 = vmul.f32 %v104, %v278
    %v281 = vadd.f32 %v275, %v279
    %v282 = vadd.f32 %v276, %v280
    %v283 = vadd.f32 %v241, %v281
    %v284 = vadd.f32 %v242, %v282
    %s285 = sld [smem:[#allocation3 + $0x4]]
    %v286 = vstv %s285
    %v287 = vmul.f32 %v91, %v286
    %v288 = vmul.f32 %v92, %v286
    %s289 = sld [smem:[#allocation3 + $0x84]]
    %v290 = vstv %s289
    %v291 = vmul.f32 %v93, %v290
    %v292 = vmul.f32 %v94, %v290
    %v293 = vadd.f32 %v287, %v291
    %v294 = vadd.f32 %v288, %v292
    %s295 = sld [smem:[#allocation3 + $0x104]]
    %v296 = vstv %s295
    %v297 = vmul.f32 %v95, %v296
    %v298 = vmul.f32 %v96, %v296
    %v299 = vadd.f32 %v293, %v297
    %v300 = vadd.f32 %v294, %v298
    %s301 = sld [smem:[#allocation3 + $0x184]]
    %v302 = vstv %s301
    %v303 = vmul.f32 %v97, %v302
    %v304 = vmul.f32 %v98, %v302
    %v305 = vadd.f32 %v299, %v303
    %v306 = vadd.f32 %v300, %v304
    %s307 = sld [smem:[#allocation3 + $0x204]]
    %v308 = vstv %s307
    %v309 = vmul.f32 %v99, %v308
    %v310 = vmul.f32 %v100, %v308
    %v311 = vadd.f32 %v305, %v309
    %v312 = vadd.f32 %v306, %v310
    %s313 = sld [smem:[#allocation3 + $0x284]]
    %v314 = vstv %s313
    %v315 = vmul.f32 %v101, %v314
    %v316 = vmul.f32 %v102, %v314
    %v317 = vadd.f32 %v311, %v315
    %v318 = vadd.f32 %v312, %v316
    %s319 = sld [smem:[#allocation3 + $0x304]]
    %v320 = vstv %s319
    %v321 = vmul.f32 %v103, %v320
    %v322 = vmul.f32 %v104, %v320
    %v323 = vadd.f32 %v317, %v321
    %v324 = vadd.f32 %v318, %v322
    %325 = vrot.lane.b32.xlu0 %v323, 127
    %v326 = vpop.permute.xlu0 %325
    %327 = vrot.lane.b32.xlu0 %v324, 127
    %v328 = vpop.permute.xlu0 %327
    %v329 = vadd.f32 %v283, %v326
    %v330 = vadd.f32 %v284, %v328
    %s331 = sld [smem:[#allocation3 + $0x5]]
    %v332 = vstv %s331
    %v333 = vmul.f32 %v91, %v332
    %v334 = vmul.f32 %v92, %v332
    %s335 = sld [smem:[#allocation3 + $0x85]]
    %v336 = vstv %s335
    %v337 = vmul.f32 %v93, %v336
    %v338 = vmul.f32 %v94, %v336
    %v339 = vadd.f32 %v333, %v337
    %v340 = vadd.f32 %v334, %v338
    %s341 = sld [smem:[#allocation3 + $0x105]]
    %v342 = vstv %s341
    %v343 = vmul.f32 %v95, %v342
    %v344 = vmul.f32 %v96, %v342
    %v345 = vadd.f32 %v339, %v343
    %v346 = vadd.f32 %v340, %v344
    %s347 = sld [smem:[#allocation3 + $0x185]]
    %v348 = vstv %s347
    %v349 = vmul.f32 %v97, %v348
    %v350 = vmul.f32 %v98, %v348
    %v351 = vadd.f32 %v345, %v349
    %v352 = vadd.f32 %v346, %v350
    %s353 = sld [smem:[#allocation3 + $0x205]]
    %v354 = vstv %s353
    %v355 = vmul.f32 %v99, %v354
    %v356 = vmul.f32 %v100, %v354
    %v357 = vadd.f32 %v351, %v355
    %v358 = vadd.f32 %v352, %v356
    %s359 = sld [smem:[#allocation3 + $0x285]]
    %v360 = vstv %s359
    %v361 = vmul.f32 %v101, %v360
    %v362 = vmul.f32 %v102, %v360
    %v363 = vadd.f32 %v357, %v361
    %v364 = vadd.f32 %v358, %v362
    %s365 = sld [smem:[#allocation3 + $0x305]]
    %v366 = vstv %s365
    %v367 = vmul.f32 %v103, %v366
    %v368 = vmul.f32 %v104, %v366
    %v369 = vadd.f32 %v363, %v367
    %v370 = vadd.f32 %v364, %v368
    %371 = vrot.lane.b32.xlu0 %v369, 126
    %v372 = vpop.permute.xlu0 %371
    %373 = vrot.lane.b32.xlu0 %v370, 126
    %v374 = vpop.permute.xlu0 %373
    %v375 = vadd.f32 %v329, %v372
    %v376 = vadd.f32 %v330, %v374
    %s377 = sld [smem:[#allocation3 + $0x6]]
    %v378 = vstv %s377
    %v379 = vmul.f32 %v91, %v378
    %v380 = vmul.f32 %v92, %v378
    %s381 = sld [smem:[#allocation3 + $0x86]]
    %v382 = vstv %s381
    %v383 = vmul.f32 %v93, %v382
    %v384 = vmul.f32 %v94, %v382
    %v385 = vadd.f32 %v379, %v383
    %v386 = vadd.f32 %v380, %v384
    %s387 = sld [smem:[#allocation3 + $0x106]]
    %v388 = vstv %s387
    %v389 = vmul.f32 %v95, %v388
    %v390 = vmul.f32 %v96, %v388
    %v391 = vadd.f32 %v385, %v389
    %v392 = vadd.f32 %v386, %v390
    %s393 = sld [smem:[#allocation3 + $0x186]]
    %v394 = vstv %s393
    %v395 = vmul.f32 %v97, %v394
    %v396 = vmul.f32 %v98, %v394
    %v397 = vadd.f32 %v391, %v395
    %v398 = vadd.f32 %v392, %v396
    %s399 = sld [smem:[#allocation3 + $0x206]]
    %v400 = vstv %s399
    %v401 = vmul.f32 %v99, %v400
    %v402 = vmul.f32 %v100, %v400
    %v403 = vadd.f32 %v397, %v401
    %v404 = vadd.f32 %v398, %v402
    %s405 = sld [smem:[#allocation3 + $0x286]]
    %v406 = vstv %s405
    %v407 = vmul.f32 %v101, %v406
    %v408 = vmul.f32 %v102, %v406
    %v409 = vadd.f32 %v403, %v407
    %v410 = vadd.f32 %v404, %v408
    %s411 = sld [smem:[#allocation3 + $0x306]]
    %v412 = vstv %s411
    %v413 = vmul.f32 %v103, %v412
    %v414 = vmul.f32 %v104, %v412
    %v415 = vadd.f32 %v409, %v413
    %v416 = vadd.f32 %v410, %v414
    %417 = vrot.lane.b32.xlu0 %v415, 125
    %v418 = vpop.permute.xlu0 %417
    %419 = vrot.lane.b32.xlu0 %v416, 125
    %v420 = vpop.permute.xlu0 %419
    %v421 = vadd.f32 %v375, %v418
    %v422 = vadd.f32 %v376, %v420
    %v423 = vxor.u32 %v421, 2147483648
    %v424 = vxor.u32 %v422, 2147483648
    %v425 = vmul.f32 %v423, 1.442695
    %v426 = vpow.pop %v425
    %v427 = vmul.f32 %v424, 1.442695
    %v428 = vpow.pop %v427
    %v429 = vadd.f32 %v426, 1.0
    %v430 = vadd.f32 %v428, 1.0
    %v431 = vrcp.pop %v429
    %v432 = vmul.f32 %v429, %v431
    %v433 = vsub.f32 1.0, %v432
    %v434 = vmul.f32 %v431, %v433
    %v435 = vadd.f32 %v431, %v434
    %vm436 = vweird.f32 %v429
    %vm437 = vweird.f32 %v431
    %vm438 = vmor %vm436, %vm437
    %v439 = vsel %vm438, %v431, %v435
    %v440 = vand.u32 2147483647, %v429
    %vm441 = vcmp.eq.f32.partialorder %v440, 8.507059e+37
    %v442 = vand.u32 %v429, 2147483648
    %v443 = vor.u32 1.1754944e-38, %v442
    %v444 = vsel %vm441, %v443, %v439
    %v445 = vmul.f32 1.0, %v444
    %v446 = vrcp.pop %v430
    %v447 = vmul.f32 %v430, %v446
    %v448 = vsub.f32 1.0, %v447
    %v449 = vmul.f32 %v446, %v448
    %v450 = vadd.f32 %v446, %v449
    %vm451 = vweird.f32 %v430
    %vm452 = vweird.f32 %v446
    %vm453 = vmor %vm451, %vm452
    %v454 = vsel %vm453, %v446, %v450
    %v455 = vand.u32 2147483647, %v430
    %vm456 = vcmp.eq.f32.partialorder %v455, 8.507059e+37
    %v457 = vand.u32 %v430, 2147483648
    %v458 = vor.u32 1.1754944e-38, %v457
    %v459 = vsel %vm456, %v458, %v454
    %v460 = vmul.f32 1.0, %v459
    %461 = vst.msk [vmem:[#allocation8] sm:$0xff] %vm57, %v445
    %462 = vst.msk [vmem:[#allocation8 + $0x8] sm:$0xff] %vm57, %v460
    %463 = vst [vmem:[#allocation2] sm:$0xff] 0.0
    %464 = vst [vmem:[#allocation2 + $0x8] sm:$0xff] 0.0
    %465 = vst [vmem:[#allocation2 + $0x10] sm:$0xff] 0.0
    %466 = vst.msk [vmem:[#allocation2 + $0x3] sm:$0xff] %vm57, %v78
    %467 = vst.msk [vmem:[#allocation2 + $0xb] sm:$0xff] %vm57, %v85
    %v468 = vld [vmem:[#allocation2] sm:$0xff]
    %v469 = vld [vmem:[#allocation2 + $0x8] sm:$0xff]
    %v470 = vld [vmem:[#allocation2 + $0x1] sm:$0xff]
    %v471 = vld [vmem:[#allocation2 + $0x9] sm:$0xff]
    %v472 = vld [vmem:[#allocation2 + $0x2] sm:$0xff]
    %v473 = vld [vmem:[#allocation2 + $0xa] sm:$0xff]
    %v474 = vld [vmem:[#allocation2 + $0x3] sm:$0xff]
    %v475 = vld [vmem:[#allocation2 + $0xb] sm:$0xff]
    %v476 = vld [vmem:[#allocation2 + $0x4] sm:$0xff]
    %v477 = vld [vmem:[#allocation2 + $0xc] sm:$0xff]
    %v478 = vld [vmem:[#allocation2 + $0x5] sm:$0xff]
    %v479 = vld [vmem:[#allocation2 + $0xd] sm:$0xff]
    %v480 = vld [vmem:[#allocation2 + $0x6] sm:$0xff]
    %v481 = vld [vmem:[#allocation2 + $0xe] sm:$0xff]
    %s482 = sld [smem:[#allocation3]]
    %v483 = vstv %s482
    %v484 = vmul.f32 %v468, %v483
    %v485 = vmul.f32 %v469, %v483
    %s486 = sld [smem:[#allocation3 + $0x80]]
    %v487 = vstv %s486
    %v488 = vmul.f32 %v470, %v487
    %v489 = vmul.f32 %v471, %v487
    %v490 = vadd.f32 %v484, %v488
    %v491 = vadd.f32 %v485, %v489
    %s492 = sld [smem:[#allocation3 + $0x100]]
    %v493 = vstv %s492
    %v494 = vmul.f32 %v472, %v493
    %v495 = vmul.f32 %v473, %v493
    %v496 = vadd.f32 %v490, %v494
    %v497 = vadd.f32 %v491, %v495
    %s498 = sld [smem:[#allocation3 + $0x180]]
    %v499 = vstv %s498
    %v500 = vmul.f32 %v474, %v499
    %v501 = vmul.f32 %v475, %v499
    %v502 = vadd.f32 %v496, %v500
    %v503 = vadd.f32 %v497, %v501
    %s504 = sld [smem:[#allocation3 + $0x200]]
    %v505 = vstv %s504
    %v506 = vmul.f32 %v476, %v505
    %v507 = vmul.f32 %v477, %v505
    %v508 = vadd.f32 %v502, %v506
    %v509 = vadd.f32 %v503, %v507
    %s510 = sld [smem:[#allocation3 + $0x280]]
    %v511 = vstv %s510
    %v512 = vmul.f32 %v478, %v511
    %v513 = vmul.f32 %v479, %v511
    %v514 = vadd.f32 %v508, %v512
    %v515 = vadd.f32 %v509, %v513
    %s516 = sld [smem:[#allocation3 + $0x300]]
    %v517 = vstv %s516
    %v518 = vmul.f32 %v480, %v517
    %v519 = vmul.f32 %v481, %v517
    %v520 = vadd.f32 %v514, %v518
    %v521 = vadd.f32 %v515, %v519
    %522 = vrot.lane.b32.xlu0 %v520, 3
    %v523 = vpop.permute.xlu0 %522
    %524 = vrot.lane.b32.xlu0 %v521, 3
    %v525 = vpop.permute.xlu0 %524
    %v526 = vadd.f32 %v523, 0.0
    %v527 = vadd.f32 %v525, 0.0
    %s528 = sld [smem:[#allocation3 + $0x1]]
    %v529 = vstv %s528
    %v530 = vmul.f32 %v468, %v529
    %v531 = vmul.f32 %v469, %v529
    %s532 = sld [smem:[#allocation3 + $0x81]]
    %v533 = vstv %s532
    %v534 = vmul.f32 %v470, %v533
    %v535 = vmul.f32 %v471, %v533
    %v536 = vadd.f32 %v530, %v534
    %v537 = vadd.f32 %v531, %v535
    %s538 = sld [smem:[#allocation3 + $0x101]]
    %v539 = vstv %s538
    %v540 = vmul.f32 %v472, %v539
    %v541 = vmul.f32 %v473, %v539
    %v542 = vadd.f32 %v536, %v540
    %v543 = vadd.f32 %v537, %v541
    %s544 = sld [smem:[#allocation3 + $0x181]]
    %v545 = vstv %s544
    %v546 = vmul.f32 %v474, %v545
    %v547 = vmul.f32 %v475, %v545
    %v548 = vadd.f32 %v542, %v546
    %v549 = vadd.f32 %v543, %v547
    %s550 = sld [smem:[#allocation3 + $0x201]]
    %v551 = vstv %s550
    %v552 = vmul.f32 %v476, %v551
    %v553 = vmul.f32 %v477, %v551
    %v554 = vadd.f32 %v548, %v552
    %v555 = vadd.f32 %v549, %v553
    %s556 = sld [smem:[#allocation3 + $0x281]]
    %v557 = vstv %s556
    %v558 = vmul.f32 %v478, %v557
    %v559 = vmul.f32 %v479, %v557
    %v560 = vadd.f32 %v554, %v558
    %v561 = vadd.f32 %v555, %v559
    %s562 = sld [smem:[#allocation3 + $0x301]]
    %v563 = vstv %s562
    %v564 = vmul.f32 %v480, %v563
    %v565 = vmul.f32 %v481, %v563
    %v566 = vadd.f32 %v560, %v564
    %v567 = vadd.f32 %v561, %v565
    %568 = vrot.lane.b32.xlu0 %v566, 2
    %v569 = vpop.permute.xlu0 %568
    %570 = vrot.lane.b32.xlu0 %v567, 2
    %v571 = vpop.permute.xlu0 %570
    %v572 = vadd.f32 %v526, %v569
    %v573 = vadd.f32 %v527, %v571
    %s574 = sld [smem:[#allocation3 + $0x2]]
    %v575 = vstv %s574
    %v576 = vmul.f32 %v468, %v575
    %v577 = vmul.f32 %v469, %v575
    %s578 = sld [smem:[#allocation3 + $0x82]]
    %v579 = vstv %s578
    %v580 = vmul.f32 %v470, %v579
    %v581 = vmul.f32 %v471, %v579
    %v582 = vadd.f32 %v576, %v580
    %v583 = vadd.f32 %v577, %v581
    %s584 = sld [smem:[#allocation3 + $0x102]]
    %v585 = vstv %s584
    %v586 = vmul.f32 %v472, %v585
    %v587 = vmul.f32 %v473, %v585
    %v588 = vadd.f32 %v582, %v586
    %v589 = vadd.f32 %v583, %v587
    %s590 = sld [smem:[#allocation3 + $0x182]]
    %v591 = vstv %s590
    %v592 = vmul.f32 %v474, %v591
    %v593 = vmul.f32 %v475, %v591
    %v594 = vadd.f32 %v588, %v592
    %v595 = vadd.f32 %v589, %v593
    %s596 = sld [smem:[#allocation3 + $0x202]]
    %v597 = vstv %s596
    %v598 = vmul.f32 %v476, %v597
    %v599 = vmul.f32 %v477, %v597
    %v600 = vadd.f32 %v594, %v598
    %v601 = vadd.f32 %v595, %v599
    %s602 = sld [smem:[#allocation3 + $0x282]]
    %v603 = vstv %s602
    %v604 = vmul.f32 %v478, %v603
    %v605 = vmul.f32 %v479, %v603
    %v606 = vadd.f32 %v600, %v604
    %v607 = vadd.f32 %v601, %v605
    %s608 = sld [smem:[#allocation3 + $0x302]]
    %v609 = vstv %s608
    %v610 = vmul.f32 %v480, %v609
    %v611 = vmul.f32 %v481, %v609
    %v612 = vadd.f32 %v606, %v610
    %v613 = vadd.f32 %v607, %v611
    %614 = vrot.lane.b32.xlu0 %v612, 1
    %v615 = vpop.permute.xlu0 %614
    %616 = vrot.lane.b32.xlu0 %v613, 1
    %v617 = vpop.permute.xlu0 %616
    %v618 = vadd.f32 %v572, %v615
    %v619 = vadd.f32 %v573, %v617
    %s620 = sld [smem:[#allocation3 + $0x3]]
    %v621 = vstv %s620
    %v622 = vmul.f32 %v468, %v621
    %v623 = vmul.f32 %v469, %v621
    %s624 = sld [smem:[#allocation3 + $0x83]]
    %v625 = vstv %s624
    %v626 = vmul.f32 %v470, %v625
    %v627 = vmul.f32 %v471, %v625
    %v628 = vadd.f32 %v622, %v626
    %v629 = vadd.f32 %v623, %v627
    %s630 = sld [smem:[#allocation3 + $0x103]]
    %v631 = vstv %s630
    %v632 = vmul.f32 %v472, %v631
    %v633 = vmul.f32 %v473, %v631
    %v634 = vadd.f32 %v628, %v632
    %v635 = vadd.f32 %v629, %v633
    %s636 = sld [smem:[#allocation3 + $0x183]]
    %v637 = vstv %s636
    %v638 = vmul.f32 %v474, %v637
    %v639 = vmul.f32 %v475, %v637
    %v640 = vadd.f32 %v634, %v638
    %v641 = vadd.f32 %v635, %v639
    %s642 = sld [smem:[#allocation3 + $0x203]]
    %v643 = vstv %s642
    %v644 = vmul.f32 %v476, %v643
    %v645 = vmul.f32 %v477, %v643
    %v646 = vadd.f32 %v640, %v644
    %v647 = vadd.f32 %v641, %v645
    %s648 = sld [smem:[#allocation3 + $0x283]]
    %v649 = vstv %s648
    %v650 = vmul.f32 %v478, %v649
    %v651 = vmul.f32 %v479, %v649
    %v652 = vadd.f32 %v646, %v650
    %v653 = vadd.f32 %v647, %v651
    %s654 = sld [smem:[#allocation3 + $0x303]]
    %v655 = vstv %s654
    %v656 = vmul.f32 %v480, %v655
    %v657 = vmul.f32 %v481, %v655
    %v658 = vadd.f32 %v652, %v656
    %v659 = vadd.f32 %v653, %v657
    %v660 = vadd.f32 %v618, %v658
    %v661 = vadd.f32 %v619, %v659
    %s662 = sld [smem:[#allocation3 + $0x4]]
    %v663 = vstv %s662
    %v664 = vmul.f32 %v468, %v663
    %v665 = vmul.f32 %v469, %v663
    %s666 = sld [smem:[#allocation3 + $0x84]]
    %v667 = vstv %s666
    %v668 = vmul.f32 %v470, %v667
    %v669 = vmul.f32 %v471, %v667
    %v670 = vadd.f32 %v664, %v668
    %v671 = vadd.f32 %v665, %v669
    %s672 = sld [smem:[#allocation3 + $0x104]]
    %v673 = vstv %s672
    %v674 = vmul.f32 %v472, %v673
    %v675 = vmul.f32 %v473, %v673
    %v676 = vadd.f32 %v670, %v674
    %v677 = vadd.f32 %v671, %v675
    %s678 = sld [smem:[#allocation3 + $0x184]]
    %v679 = vstv %s678
    %v680 = vmul.f32 %v474, %v679
    %v681 = vmul.f32 %v475, %v679
    %v682 = vadd.f32 %v676, %v680
    %v683 = vadd.f32 %v677, %v681
    %s684 = sld [smem:[#allocation3 + $0x204]]
    %v685 = vstv %s684
    %v686 = vmul.f32 %v476, %v685
    %v687 = vmul.f32 %v477, %v685
    %v688 = vadd.f32 %v682, %v686
    %v689 = vadd.f32 %v683, %v687
    %s690 = sld [smem:[#allocation3 + $0x284]]
    %v691 = vstv %s690
    %v692 = vmul.f32 %v478, %v691
    %v693 = vmul.f32 %v479, %v691
    %v694 = vadd.f32 %v688, %v692
    %v695 = vadd.f32 %v689, %v693
    %s696 = sld [smem:[#allocation3 + $0x304]]
    %v697 = vstv %s696
    %v698 = vmul.f32 %v480, %v697
    %v699 = vmul.f32 %v481, %v697
    %v700 = vadd.f32 %v694, %v698
    %v701 = vadd.f32 %v695, %v699
    %702 = vrot.lane.b32.xlu0 %v700, 127
    %v703 = vpop.permute.xlu0 %702
    %704 = vrot.lane.b32.xlu0 %v701, 127
    %v705 = vpop.permute.xlu0 %704
    %v706 = vadd.f32 %v660, %v703
    %v707 = vadd.f32 %v661, %v705
    %s708 = sld [smem:[#allocation3 + $0x5]]
    %v709 = vstv %s708
    %v710 = vmul.f32 %v468, %v709
    %v711 = vmul.f32 %v469, %v709
    %s712 = sld [smem:[#allocation3 + $0x85]]
    %v713 = vstv %s712
    %v714 = vmul.f32 %v470, %v713
    %v715 = vmul.f32 %v471, %v713
    %v716 = vadd.f32 %v710, %v714
    %v717 = vadd.f32 %v711, %v715
    %s718 = sld [smem:[#allocation3 + $0x105]]
    %v719 = vstv %s718
    %v720 = vmul.f32 %v472, %v719
    %v721 = vmul.f32 %v473, %v719
    %v722 = vadd.f32 %v716, %v720
    %v723 = vadd.f32 %v717, %v721
    %s724 = sld [smem:[#allocation3 + $0x185]]
    %v725 = vstv %s724
    %v726 = vmul.f32 %v474, %v725
    %v727 = vmul.f32 %v475, %v725
    %v728 = vadd.f32 %v722, %v726
    %v729 = vadd.f32 %v723, %v727
    %s730 = sld [smem:[#allocation3 + $0x205]]
    %v731 = vstv %s730
    %v732 = vmul.f32 %v476, %v731
    %v733 = vmul.f32 %v477, %v731
    %v734 = vadd.f32 %v728, %v732
    %v735 = vadd.f32 %v729, %v733
    %s736 = sld [smem:[#allocation3 + $0x285]]
    %v737 = vstv %s736
    %v738 = vmul.f32 %v478, %v737
    %v739 = vmul.f32 %v479, %v737
    %v740 = vadd.f32 %v734, %v738
    %v741 = vadd.f32 %v735, %v739
    %s742 = sld [smem:[#allocation3 + $0x305]]
    %v743 = vstv %s742
    %v744 = vmul.f32 %v480, %v743
    %v745 = vmul.f32 %v481, %v743
    %v746 = vadd.f32 %v740, %v744
    %v747 = vadd.f32 %v741, %v745
    %748 = vrot.lane.b32.xlu0 %v746, 126
    %v749 = vpop.permute.xlu0 %748
    %750 = vrot.lane.b32.xlu0 %v747, 126
    %v751 = vpop.permute.xlu0 %750
    %v752 = vadd.f32 %v706, %v749
    %v753 = vadd.f32 %v707, %v751
    %s754 = sld [smem:[#allocation3 + $0x6]]
    %v755 = vstv %s754
    %v756 = vmul.f32 %v468, %v755
    %v757 = vmul.f32 %v469, %v755
    %s758 = sld [smem:[#allocation3 + $0x86]]
    %v759 = vstv %s758
    %v760 = vmul.f32 %v470, %v759
    %v761 = vmul.f32 %v471, %v759
    %v762 = vadd.f32 %v756, %v760
    %v763 = vadd.f32 %v757, %v761
    %s764 = sld [smem:[#allocation3 + $0x106]]
    %v765 = vstv %s764
    %v766 = vmul.f32 %v472, %v765
    %v767 = vmul.f32 %v473, %v765
    %v768 = vadd.f32 %v762, %v766
    %v769 = vadd.f32 %v763, %v767
    %s770 = sld [smem:[#allocation3 + $0x186]]
    %v771 = vstv %s770
    %v772 = vmul.f32 %v474, %v771
    %v773 = vmul.f32 %v475, %v771
    %v774 = vadd.f32 %v768, %v772
    %v775 = vadd.f32 %v769, %v773
    %s776 = sld [smem:[#allocation3 + $0x206]]
    %v777 = vstv %s776
    %v778 = vmul.f32 %v476, %v777
    %v779 = vmul.f32 %v477, %v777
    %v780 = vadd.f32 %v774, %v778
    %v781 = vadd.f32 %v775, %v779
    %s782 = sld [smem:[#allocation3 + $0x286]]
    %v783 = vstv %s782
    %v784 = vmul.f32 %v478, %v783
    %v785 = vmul.f32 %v479, %v783
    %v786 = vadd.f32 %v780, %v784
    %v787 = vadd.f32 %v781, %v785
    %s788 = sld [smem:[#allocation3 + $0x306]]
    %v789 = vstv %s788
    %v790 = vmul.f32 %v480, %v789
    %v791 = vmul.f32 %v481, %v789
    %v792 = vadd.f32 %v786, %v790
    %v793 = vadd.f32 %v787, %v791
    %794 = vrot.lane.b32.xlu0 %v792, 125
    %v795 = vpop.permute.xlu0 %794
    %796 = vrot.lane.b32.xlu0 %v793, 125
    %v797 = vpop.permute.xlu0 %796
    %v798 = vadd.f32 %v752, %v795
    %v799 = vadd.f32 %v753, %v797
    %v800 = vxor.u32 %v798, 2147483648
    %v801 = vxor.u32 %v799, 2147483648
    %v802 = vmul.f32 %v800, 1.442695
    %v803 = vpow.pop %v802
    %v804 = vmul.f32 %v801, 1.442695
    %v805 = vpow.pop %v804
    %v806 = vadd.f32 %v803, 1.0
    %v807 = vadd.f32 %v805, 1.0
    %v808 = vrcp.pop %v806
    %v809 = vmul.f32 %v806, %v808
    %v810 = vsub.f32 1.0, %v809
    %v811 = vmul.f32 %v808, %v810
    %v812 = vadd.f32 %v808, %v811
    %vm813 = vweird.f32 %v806
    %vm814 = vweird.f32 %v808
    %vm815 = vmor %vm813, %vm814
    %v816 = vsel %vm815, %v808, %v812
    %v817 = vand.u32 2147483647, %v806
    %vm818 = vcmp.eq.f32.partialorder %v817, 8.507059e+37
    %v819 = vand.u32 %v806, 2147483648
    %v820 = vor.u32 1.1754944e-38, %v819
    %v821 = vsel %vm818, %v820, %v816
    %v822 = vmul.f32 1.0, %v821
    %v823 = vrcp.pop %v807
    %v824 = vmul.f32 %v807, %v823
    %v825 = vsub.f32 1.0, %v824
    %v826 = vmul.f32 %v823, %v825
    %v827 = vadd.f32 %v823, %v826
    %vm828 = vweird.f32 %v807
    %vm829 = vweird.f32 %v823
    %vm830 = vmor %vm828, %vm829
    %v831 = vsel %vm830, %v823, %v827
    %v832 = vand.u32 2147483647, %v807
    %vm833 = vcmp.eq.f32.partialorder %v832, 8.507059e+37
    %v834 = vand.u32 %v807, 2147483648
    %v835 = vor.u32 1.1754944e-38, %v834
    %v836 = vsel %vm833, %v835, %v831
    %v837 = vmul.f32 1.0, %v836
    %s838 = scalar_lea.vmem [#allocation8], 16
    %839 = vst.msk [vmem:[%s838] sm:$0xff] %vm57, %v822
    %840 = vst.msk [vmem:[%s838 + $0x8] sm:$0xff] %vm57, %v837
    // Predicated region
    $region18: #{tpu_custom_call.1} parent=1 // pred_check
      _
    $region19: #{tpu_custom_call.1} parent=1 // pred_check_branch
      %842 = sbr.rel (0) target = $region21
    $region20: #{tpu_custom_call.1} parent=1 // pred_region
      %844 = vsyncadd [#allocation5], 0
      %s845 = sshll.u32 [#allocation8], 4
      %s846 = int_to_ptr.vmem [resolvable:$true] %s845
      %s847 = sshll.u32 %s2, 4
      %s848 = int_to_ptr.hbm [resolvable:$true] %s847
      %853 = dma.vmem_to_hbm [thread:$0]  %s846, 512, %s848, [#allocation5], 128, 128, 8
    $region21: #{tpu_custom_call.1} parent=1 // pred_fallthru
      _
    // Predicated region
    $region22: #{tpu_custom_call.1} parent=1 // pred_check
      _
    $region23: #{tpu_custom_call.1} parent=1 // pred_check_branch
      %855 = sbr.rel (0) target = $region25
    $region24: #{tpu_custom_call.1} parent=1 // pred_region
      %857 = dma.done [#allocation5], 512
    $region25: #{tpu_custom_call.1} parent=1 // pred_fallthru
      _
    %858 = vsyncpa [#allocation4], 1
    %859 = vsyncpa [#allocation5], 1
    %860 = vsyncpa [#allocation6], 1

</llo_original>
